<compile_context>
chip_gen: v7x
topology: tpu7x:2x2x1
jax: 0.10.0
libtpu: 0.0.40
codegen_flags: <defaults>
</compile_context>

<pallas_src>
import functools

import jax
import jax.numpy as jnp
from jax import lax
from jax.experimental import pallas as pl
from jax.experimental.pallas import tpu as pltpu


def _device_kind():
    try:
        return jax.devices()[0].device_kind.lower()
    except Exception:
        return ""


_KIND = _device_kind()
# v5e and older have no bf16 VPU/EUP -> keep the N^2 gate math in f32 there.
_OLD_GEN = any(t in _KIND for t in ("v2", "v3", "v4", "v5"))
GATE_DTYPE = jnp.float32 if _OLD_GEN else jnp.bfloat16
# 128-MiB-VMEM chips get a big scoped budget; otherwise stay well under v7x's
# 64-MiB physical VMEM (leave headroom for compiler scratch / semaphores).
_VMEM_LIMIT = (100 * 1024 * 1024
               if any(t in _KIND for t in ("v4", "v5", "v6"))
               else 48 * 1024 * 1024)


# ---------------------------------------------------------------------------
# Kernels
# ---------------------------------------------------------------------------

def _linear_relu_kernel(x_ref, w_ref, b_ref, o_ref):
    h = jnp.dot(x_ref[...], w_ref[...], preferred_element_type=jnp.float32)
    o_ref[...] = jnp.maximum(h + b_ref[...], 0.0)


def _faconv_kernel(nnz_ref, fetch_ref, gl_ref, gr_ref, s_ref, hsrc_ref,
                   raw_ref, o_ref, acc_ref, *, eps):
    i = pl.program_id(0)                 # destination-row tile
    k = pl.program_id(1)                 # source-column tile (reduction axis)

    @pl.when(k == 0)
    def _init():
        acc_ref[...] = jnp.zeros(acc_ref.shape, acc_ref.dtype)

    # Skip compute entirely for all-zero S blocks (block-sparse adjacency).
    @pl.when(nnz_ref[i, k] > 0)
    def _accumulate():
        # alpha_ij = tanh(att_r.h_i + att_l.h_j): per-node gates precomputed,
        # broadcast add [TM,1] + [1,TK].  Gate dtype is bf16 on v6e/v7x,
        # f32 on v5e-and-older (no bf16 VPU/EUP there).
        alpha = jnp.tanh(gr_ref[...] + gl_ref[...])                  # [TM, TK]
        # Mask AFTER tanh so non-edges are exactly zero.
        coef = s_ref[...] * alpha                                    # [TM, TK]
        # bf16 MXU operands, f32 accumulation (astype is a no-op on the bf16 path).
        acc_ref[...] += jnp.dot(coef.astype(jnp.bfloat16), hsrc_ref[...],
                                preferred_element_type=jnp.float32)  # [TM, H]

    @pl.when(k == pl.num_programs(1) - 1)
    def _finalize():
        # FAConv adds eps*x_0 internally; FAGCN.forward adds eps*raw again.
        o_ref[...] = acc_ref[...] + (2.0 * eps) * raw_ref[...]


def _linear_logsoftmax_kernel(h_ref, w_ref, b_ref, o_ref):
    logits = jnp.dot(h_ref[...], w_ref[...],
                     preferred_element_type=jnp.float32) + b_ref[...]
    m = jnp.max(logits, axis=1, keepdims=True)
    z = logits - m
    lse = jnp.log(jnp.sum(jnp.exp(z), axis=1, keepdims=True))
    o_ref[...] = z - lse


# ---------------------------------------------------------------------------
# Wrappers
# ---------------------------------------------------------------------------

def _tile(n, t):
    t = min(t, n)
    if n % t != 0:
        raise ValueError(f"dimension {n} must be divisible by tile {t}")
    return t, n // t


def _compiler_params(semantics):
    return pltpu.CompilerParams(dimension_semantics=semantics,
                                vmem_limit_bytes=_VMEM_LIMIT)


def linear1_relu(x, w1, b1, *, tm):
    n, c_in = x.shape
    hid = w1.shape[1]
    tm, nt = _tile(n, tm)
    return pl.pallas_call(
        _linear_relu_kernel,
        out_shape=jax.ShapeDtypeStruct((n, hid), jnp.float32),
        grid=(nt,),
        in_specs=[
            pl.BlockSpec((tm, c_in), lambda i: (i, 0)),
            pl.BlockSpec((c_in, hid), lambda i: (0, 0)),
            pl.BlockSpec((1, hid), lambda i: (0, 0)),
        ],
        out_specs=pl.BlockSpec((tm, hid), lambda i: (i, 0)),
        compiler_params=_compiler_params(("parallel",)),
    )(x, w1, b1)


def faconv_layer(h_bf16, gl, gr, raw, s_bf16, blk_nnz, blk_fetch, *,
                 eps, tm, tk):
    n, hid = raw.shape
    tm, nr = _tile(n, tm)
    tk, nc = _tile(n, tk)
    cost = pl.CostEstimate(
        flops=2 * n * n * hid + 3 * n * n,
        transcendentals=n * n,
        bytes_accessed=2 * n * n + 2 * n * hid + 3 * 4 * n * hid,
    )
    grid_spec = pltpu.PrefetchScalarGridSpec(
        num_scalar_prefetch=2,                       # block-nnz + fetch tables
        grid=(nr, nc),                               # rows "parallel", cols "arbitrary"
        in_specs=[
            # gl: [1, N] source-side gate row  (deduped on skipped blocks)
            pl.BlockSpec((1, tk), lambda i, k, nz, fc: (0, fc[i, k])),
            # gr: [N, 1] dest-side gate column
            pl.BlockSpec((tm, 1), lambda i, k, nz, fc: (i, 0)),
            # S block (bf16) -- dominant stream, deduped on skipped blocks
            pl.BlockSpec((tm, tk), lambda i, k, nz, fc: (i, fc[i, k])),
            # h source block (bf16, pre-cast once per layer outside the kernel)
            pl.BlockSpec((tk, hid), lambda i, k, nz, fc: (fc[i, k], 0)),
            # raw dest-row tile (f32, for the residual at finalize)
            pl.BlockSpec((tm, hid), lambda i, k, nz, fc: (i, 0)),
        ],
        out_specs=pl.BlockSpec((tm, hid), lambda i, k, nz, fc: (i, 0)),
        scratch_shapes=[pltpu.VMEM((tm, hid), jnp.float32)],
    )
    return pl.pallas_call(
        functools.partial(_faconv_kernel, eps=eps),
        out_shape=jax.ShapeDtypeStruct((n, hid), jnp.float32),
        grid_spec=grid_spec,
        compiler_params=_compiler_params(("parallel", "arbitrary")),
        cost_estimate=cost,
    )(blk_nnz, blk_fetch, gl, gr, s_bf16, h_bf16, raw)


def linear2_logsoftmax(h, w2, b2, *, tm):
    n, hid = h.shape
    c_out = w2.shape[1]
    tm, nt = _tile(n, tm)
    return pl.pallas_call(
        _linear_logsoftmax_kernel,
        out_shape=jax.ShapeDtypeStruct((n, c_out), jnp.float32),
        grid=(nt,),
        in_specs=[
            pl.BlockSpec((tm, hid), lambda i: (i, 0)),
            pl.BlockSpec((hid, c_out), lambda i: (0, 0)),
            pl.BlockSpec((1, c_out), lambda i: (0, 0)),
        ],
        out_specs=pl.BlockSpec((tm, c_out), lambda i: (i, 0)),
        compiler_params=_compiler_params(("parallel",)),
    )(h, w2, b2)


def fagcn_forward(x, s_bf16, blk_nnz, blk_fetch, w1, b1, att, w2, b2, *,
                  eps, layer_num, tm=128, tk=128, gate_dtype=GATE_DTYPE):
    h = linear1_relu(x, w1, b1, tm=tm)
    raw = h
    for l in range(layer_num):
        # Tiny [N,H]x[H,2] gate matmul stays in plain XLA (once per layer, off
        # the per-tile critical path).  Col 0 = att_l.h (source side),
        # col 1 = att_r.h (dest side).
        g = (h @ att[l].T).astype(gate_dtype)
        gl = g[:, 0].reshape(1, -1)          # [1, N] lane-major source gates
        gr = g[:, 1].reshape(-1, 1)          # [N, 1] sublane-major dest gates
        h = faconv_layer(h.astype(jnp.bfloat16), gl, gr, raw, s_bf16,
                         blk_nnz, blk_fetch, eps=eps, tm=tm, tk=tk)
    return linear2_logsoftmax(h, w2, b2, tm=tm)


# ---------------------------------------------------------------------------
# Glue (plain JAX): normalized adjacency, block tables, init, reference
# ---------------------------------------------------------------------------

def build_normalized_adjacency(edge_index, num_nodes):
    """S[dst, src] = 1/sqrt(d_dst * d_src) for every edge src -> dst."""
    row, col = edge_index[0], edge_index[1]            # row = src, col = dst
    deg = jnp.zeros((num_nodes,), jnp.float32).at[col].add(1.0)
    dinv = jnp.where(deg > 0, lax.rsqrt(deg), 0.0)
    w = dinv[row] * dinv[col]
    return jnp.zeros((num_nodes, num_nodes), jnp.float32).at[col, row].add(w)


def build_block_tables(s, tm, tk):
    """Per (row-tile, col-tile): nonzero flag + DMA-dedup fetch-column index."""
    n = s.shape[0]
    nr, nc = n // tm, n // tk
    nz = (s != 0).reshape(nr, tm, nc, tk).any(axis=(1, 3))          # [nr, nc]
    blk_nnz = nz.astype(jnp.int32)
    cols = jnp.broadcast_to(jnp.arange(nc, dtype=jnp.int32)[None, :], (nr, nc))
    marked = jnp.where(nz, cols, jnp.int32(-1))
    # Most recent non-zero column <= k (or 0): consecutive skipped blocks keep
    # the same fetch index, so their DMAs are deduped by the pipeline.
    blk_fetch = jnp.maximum(lax.cummax(marked, axis=1), 0).astype(jnp.int32)
    return blk_nnz, blk_fetch


def _xavier_normal(key, out_dim, in_dim, gain):
    std = gain * (2.0 / (in_dim + out_dim)) ** 0.5
    return std * jax.random.normal(key, (out_dim, in_dim), dtype=jnp.float32)


def fagcn_reference(x, s, w1, b1, att, w2, b2, eps, layer_num, *,
                    gate_dtype=jnp.float32, mxu_dtype=jnp.float32):
    """Pure-JAX reference.  Defaults give full-f32 math; pass bf16 s /
    gate_dtype / mxu_dtype to mirror the kernel's precision choices."""
    h = jax.nn.relu(x @ w1 + b1)
    raw = h
    for l in range(layer_num):
        g = (h @ att[l].T).astype(gate_dtype)          # [N, 2]
        alpha = jnp.tanh(g[:, 1:2] + g[:, 0:1].T)      # [N, N]
        coef = (s * alpha).astype(mxu_dtype)
        agg = jnp.dot(coef, h.astype(mxu_dtype),
                      preferred_element_type=jnp.float32)
        h = agg + (2.0 * eps) * raw
    return jax.nn.log_softmax(h @ w2 + b2, axis=1)


if __name__ == "__main__":
    N = 256            # nodes
    IN_C = 16          # in_channels
    HID = 32           # hidden_channels
    OUT_C = 8          # out_channels
    EPS = 0.3
    LAYER_NUM = 2
    TM = 128           # 2 dst-row tiles  -> "parallel" axis (balances v7x's 2 TCs)
    TK = 128           # 2 src-col tiles  -> "arbitrary" reduction axis w/ block skip

    key = jax.random.PRNGKey(0)
    k_x, k_w1, k_b1, k_att, k_w2, k_b2 = jax.random.split(key, 6)

    x = jax.random.normal(k_x, (N, IN_C), dtype=jnp.float32)

    # Two disjoint ring+chord communities of 128 nodes -> the two off-diagonal
    # 128x128 blocks of S are all-zero, exercising the block-skip path.
    half = N // 2
    idx = jnp.arange(half)
    s_loc = jnp.concatenate([idx, (idx + 1) % half, idx, (idx + 7) % half])
    d_loc = jnp.concatenate([(idx + 1) % half, idx, (idx + 7) % half, idx])
    src = jnp.concatenate([s_loc, s_loc + half])
    dst = jnp.concatenate([d_loc, d_loc + half])
    edge_index = jnp.stack([src, dst]).astype(jnp.int32)

    s_f32 = build_normalized_adjacency(edge_index, N)
    s_bf16 = s_f32.astype(jnp.bfloat16)        # dominant array streamed in bf16
    blk_nnz, blk_fetch = build_block_tables(s_bf16, TM, TK)

    # Parameters (xavier_normal gain=1.414 for linear weights, as in the module).
    w1 = _xavier_normal(k_w1, HID, IN_C, gain=1.414).T      # [IN_C, HID]
    w2 = _xavier_normal(k_w2, OUT_C, HID, gain=1.414).T     # [HID, OUT_C]
    b1 = 0.02 * jax.random.normal(k_b1, (1, HID), dtype=jnp.float32)
    b2 = 0.02 * jax.random.normal(k_b2, (1, OUT_C), dtype=jnp.float32)
    # att[l] = [att_l ; att_r] packed as [2, HID].
    att = _xavier_normal(k_att, 2 * LAYER_NUM, HID, gain=1.0).reshape(
        LAYER_NUM, 2, HID)

    fwd = jax.jit(functools.partial(fagcn_forward, eps=EPS,
                                    layer_num=LAYER_NUM, tm=TM, tk=TK))
    out = jax.block_until_ready(fwd(x, s_bf16, blk_nnz, blk_fetch,
                                    w1, b1, att, w2, b2))

    # Matched-precision reference (same bf16 S / gate dtype / MXU operands).
    ref_matched = fagcn_reference(x, s_bf16, w1, b1, att, w2, b2, EPS,
                                  LAYER_NUM, gate_dtype=GATE_DTYPE,
                                  mxu_dtype=jnp.bfloat16)
    # Full-f32 sanity reference (true f32 normalization / gates / matmul).
    ref_f32 = fagcn_reference(x, s_f32, w1, b1, att, w2, b2, EPS, LAYER_NUM)

    assert out.shape == (N, OUT_C)
    assert bool(jnp.isfinite(out).all())
    err_matched = float(jnp.max(jnp.abs(out - ref_matched)))
    err_f32 = float(jnp.max(jnp.abs(out - ref_f32)))
    assert err_matched < 5e-2, f"mismatch vs matched-precision ref: {err_matched}"
    assert err_f32 < 5e-1, f"mismatch vs f32 ref: {err_f32}"

    print("KERNEL_OK")
</pallas_src>

<mosaic_0001>
module attributes {stable_mosaic.version = 11 : i64} {
  func.func @_linear_relu_kernel(%arg0: i32, %arg1: memref<128x16xf32, #tpu.memory_space<vmem>>, %arg2: memref<16x32xf32, #tpu.memory_space<vmem>>, %arg3: memref<1x32xf32, #tpu.memory_space<vmem>>, %arg4: memref<128x32xf32, #tpu.memory_space<vmem>>) attributes {dimension_semantics = [#tpu.dimension_semantics<parallel>], iteration_bounds = array<i64: 2>, scalar_prefetch = 0 : i64, scratch_operands = 0 : i64, tpu.core_type = #tpu.core_type<tc>, window_params = [{transform_indices = @transform_0, window_bounds = array<i64: 128, 16>}, {pipeline_mode = #tpu.pipeline_mode<synchronous>, transform_indices = @transform_1, window_bounds = array<i64: 16, 32>}, {pipeline_mode = #tpu.pipeline_mode<synchronous>, transform_indices = @transform_2, window_bounds = array<i64: 1, 32>}, {transform_indices = @transform_3, window_bounds = array<i64: 128, 32>}]} {
    %c0 = arith.constant 0 : index
    %c0_0 = arith.constant 0 : index
    %0 = vector.load %arg1[%c0, %c0_0] : memref<128x16xf32, #tpu.memory_space<vmem>>, vector<128x16xf32>
    %c0_1 = arith.constant 0 : index
    %c0_2 = arith.constant 0 : index
    %1 = vector.load %arg2[%c0_1, %c0_2] : memref<16x32xf32, #tpu.memory_space<vmem>>, vector<16x32xf32>
    %cst = arith.constant dense<0.000000e+00> : vector<128x32xf32>
    %2 = tpu.matmul %0, %1, %cst {dimension_numbers = #tpu.dot_dimension_numbers<[1], [0], [0], [1], [0, 0, 1, 1], [], []>} : vector<128x16xf32>, vector<16x32xf32>, vector<128x32xf32> -> vector<128x32xf32>
    %c0_3 = arith.constant 0 : index
    %c0_4 = arith.constant 0 : index
    %3 = vector.load %arg3[%c0_3, %c0_4] : memref<1x32xf32, #tpu.memory_space<vmem>>, vector<1x32xf32>
    %4 = vector.broadcast %3 : vector<1x32xf32> to vector<128x32xf32>
    %5 = arith.addf %2, %4 : vector<128x32xf32>
    %cst_5 = arith.constant 0.000000e+00 : f32
    %6 = vector.broadcast %cst_5 : f32 to vector<128x32xf32>
    %7 = arith.maximumf %5, %6 : vector<128x32xf32>
    %c0_6 = arith.constant 0 : index
    %c0_7 = arith.constant 0 : index
    %8 = vector.load %arg4[%c0_6, %c0_7] : memref<128x32xf32, #tpu.memory_space<vmem>>, vector<128x32xf32>
    tpu.vector_store %arg4[%c0_6, %c0_7], %7 {strides = array<i32>} : memref<128x32xf32, #tpu.memory_space<vmem>>, vector<128x32xf32>,
    return
  }
  func.func @transform_0(%arg0: i32) -> (i32, i32) {
    %c0_i32 = arith.constant 0 : i32
    %c0_i32_0 = arith.constant 0 : i32
    return %arg0, %c0_i32 : i32, i32
  }
  func.func @transform_1(%arg0: i32) -> (i32, i32) {
    %c0_i32 = arith.constant 0 : i32
    %c0_i32_0 = arith.constant 0 : i32
    %c0_i32_1 = arith.constant 0 : i32
    return %c0_i32, %c0_i32_0 : i32, i32
  }
  func.func @transform_2(%arg0: i32) -> (i32, i32) {
    %c0_i32 = arith.constant 0 : i32
    %c0_i32_0 = arith.constant 0 : i32
    %c0_i32_1 = arith.constant 0 : i32
    return %c0_i32, %c0_i32_0 : i32, i32
  }
  func.func @transform_3(%arg0: i32) -> (i32, i32) {
    %c0_i32 = arith.constant 0 : i32
    %c0_i32_0 = arith.constant 0 : i32
    return %arg0, %c0_i32 : i32, i32
  }
}

module attributes {stable_mosaic.version = 11 : i64} {
  func.func @_faconv_kernel(%arg0: i32, %arg1: i32, %arg2: memref<2x2xi32, #tpu.memory_space<smem>>, %arg3: memref<2x2xi32, #tpu.memory_space<smem>>, %arg4: memref<1x128xbf16, #tpu.memory_space<vmem>>, %arg5: memref<128x1xbf16, #tpu.memory_space<vmem>>, %arg6: memref<128x128xbf16, #tpu.memory_space<vmem>>, %arg7: memref<128x32xbf16, #tpu.memory_space<vmem>>, %arg8: memref<128x32xf32, #tpu.memory_space<vmem>>, %arg9: memref<128x32xf32, #tpu.memory_space<vmem>>, %arg10: memref<128x32xf32, #tpu.memory_space<vmem>>) attributes {dimension_semantics = [#tpu.dimension_semantics<parallel>, #tpu.dimension_semantics<arbitrary>], iteration_bounds = array<i64: 2, 2>, scalar_prefetch = 2 : i64, scratch_operands = 1 : i64, tpu.core_type = #tpu.core_type<tc>, window_params = [{transform_indices = @transform_0, window_bounds = array<i64: 1, 128>}, {transform_indices = @transform_1, window_bounds = array<i64: 128, 1>}, {transform_indices = @transform_2, window_bounds = array<i64: 128, 128>}, {transform_indices = @transform_3, window_bounds = array<i64: 128, 32>}, {transform_indices = @transform_4, window_bounds = array<i64: 128, 32>}, {transform_indices = @transform_5, window_bounds = array<i64: 128, 32>}]} {
    %c0_i32 = arith.constant 0 : i32
    %0 = arith.cmpi eq, %arg1, %c0_i32 : i32
    %1 = arith.extui %0 : i1 to i32
    %c0_i32_0 = arith.constant 0 : i32
    %2 = arith.cmpi ne, %1, %c0_i32_0 : i32
    scf.if %2 {
      %cst = arith.constant 0.000000e+00 : f32
      %12 = vector.broadcast %cst : f32 to vector<128x32xf32>
      %c0 = arith.constant 0 : index
      %c0_4 = arith.constant 0 : index
      %13 = vector.load %arg10[%c0, %c0_4] : memref<128x32xf32, #tpu.memory_space<vmem>>, vector<128x32xf32>
      tpu.vector_store %arg10[%c0, %c0_4], %12 {strides = array<i32>} : memref<128x32xf32, #tpu.memory_space<vmem>>, vector<128x32xf32>,
    } else {
    }
    %3 = arith.index_cast %arg0 : i32 to index
    %4 = arith.index_cast %arg1 : i32 to index
    %5 = memref.load %arg2[%3, %4] : memref<2x2xi32, #tpu.memory_space<smem>>
    %c0_i32_1 = arith.constant 0 : i32
    %6 = arith.cmpi sgt, %5, %c0_i32_1 : i32
    %7 = arith.extui %6 : i1 to i32
    %c0_i32_2 = arith.constant 0 : i32
    %8 = arith.cmpi ne, %7, %c0_i32_2 : i32
    scf.if %8 {
      %c0 = arith.constant 0 : index
      %c0_4 = arith.constant 0 : index
      %12 = vector.load %arg5[%c0, %c0_4] : memref<128x1xbf16, #tpu.memory_space<vmem>>, vector<128x1xbf16>
      %c0_5 = arith.constant 0 : index
      %c0_6 = arith.constant 0 : index
      %13 = vector.load %arg4[%c0_5, %c0_6] : memref<1x128xbf16, #tpu.memory_space<vmem>>, vector<1x128xbf16>
      %14 = vector.broadcast %12 : vector<128x1xbf16> to vector<128x128xbf16>
      %15 = vector.broadcast %13 : vector<1x128xbf16> to vector<128x128xbf16>
      %16 = arith.addf %14, %15 : vector<128x128xbf16>
      %17 = math.tanh %16 : vector<128x128xbf16>
      %c0_7 = arith.constant 0 : index
      %c0_8 = arith.constant 0 : index
      %18 = vector.load %arg6[%c0_7, %c0_8] : memref<128x128xbf16, #tpu.memory_space<vmem>>, vector<128x128xbf16>
      %19 = arith.mulf %18, %17 : vector<128x128xbf16>
      %c0_9 = arith.constant 0 : index
      %c0_10 = arith.constant 0 : index
      %20 = vector.load %arg10[%c0_9, %c0_10] : memref<128x32xf32, #tpu.memory_space<vmem>>, vector<128x32xf32>
      %c0_11 = arith.constant 0 : index
      %c0_12 = arith.constant 0 : index
      %21 = vector.load %arg7[%c0_11, %c0_12] : memref<128x32xbf16, #tpu.memory_space<vmem>>, vector<128x32xbf16>
      %cst = arith.constant dense<0.000000e+00> : vector<128x32xf32>
      %22 = tpu.matmul %19, %21, %cst {dimension_numbers = #tpu.dot_dimension_numbers<[1], [0], [0], [1], [0, 0, 1, 1], [], []>} : vector<128x128xbf16>, vector<128x32xbf16>, vector<128x32xf32> -> vector<128x32xf32>
      %23 = arith.addf %20, %22 : vector<128x32xf32>
      %c0_13 = arith.constant 0 : index
      %c0_14 = arith.constant 0 : index
      %24 = vector.load %arg10[%c0_13, %c0_14] : memref<128x32xf32, #tpu.memory_space<vmem>>, vector<128x32xf32>
      tpu.vector_store %arg10[%c0_13, %c0_14], %23 {strides = array<i32>} : memref<128x32xf32, #tpu.memory_space<vmem>>, vector<128x32xf32>,
    } else {
    }
    %c1_i32 = arith.constant 1 : i32
    %9 = arith.cmpi eq, %arg1, %c1_i32 : i32
    %10 = arith.extui %9 : i1 to i32
    %c0_i32_3 = arith.constant 0 : i32
    %11 = arith.cmpi ne, %10, %c0_i32_3 : i32
    scf.if %11 {
      %c0 = arith.constant 0 : index
      %c0_4 = arith.constant 0 : index
      %12 = vector.load %arg10[%c0, %c0_4] : memref<128x32xf32, #tpu.memory_space<vmem>>, vector<128x32xf32>
      %c0_5 = arith.constant 0 : index
      %c0_6 = arith.constant 0 : index
      %13 = vector.load %arg8[%c0_5, %c0_6] : memref<128x32xf32, #tpu.memory_space<vmem>>, vector<128x32xf32>
      %cst = arith.constant 6.000000e-01 : f32
      %14 = vector.broadcast %cst : f32 to vector<128x32xf32>
      %15 = arith.mulf %14, %13 : vector<128x32xf32>
      %16 = arith.addf %12, %15 : vector<128x32xf32>
      %c0_7 = arith.constant 0 : index
      %c0_8 = arith.constant 0 : index
      %17 = vector.load %arg9[%c0_7, %c0_8] : memref<128x32xf32, #tpu.memory_space<vmem>>, vector<128x32xf32>
      tpu.vector_store %arg9[%c0_7, %c0_8], %16 {strides = array<i32>} : memref<128x32xf32, #tpu.memory_space<vmem>>, vector<128x32xf32>,
    } else {
    }
    return
  }
  func.func @transform_0(%arg0: i32, %arg1: i32, %arg2: memref<2x2xi32, #tpu.memory_space<smem>>, %arg3: memref<2x2xi32, #tpu.memory_space<smem>>) -> (i32, i32) {
    %0 = arith.index_cast %arg0 : i32 to index
    %1 = arith.index_cast %arg1 : i32 to index
    %2 = memref.load %arg3[%0, %1] : memref<2x2xi32, #tpu.memory_space<smem>>
    %c0_i32 = arith.constant 0 : i32
    %c0_i32_0 = arith.constant 0 : i32
    return %c0_i32, %2 : i32, i32
  }
  func.func @transform_1(%arg0: i32, %arg1: i32, %arg2: memref<2x2xi32, #tpu.memory_space<smem>>, %arg3: memref<2x2xi32, #tpu.memory_space<smem>>) -> (i32, i32) {
    %c0_i32 = arith.constant 0 : i32
    %c0_i32_0 = arith.constant 0 : i32
    return %arg0, %c0_i32 : i32, i32
  }
  func.func @transform_2(%arg0: i32, %arg1: i32, %arg2: memref<2x2xi32, #tpu.memory_space<smem>>, %arg3: memref<2x2xi32, #tpu.memory_space<smem>>) -> (i32, i32) {
    %0 = arith.index_cast %arg0 : i32 to index
    %1 = arith.index_cast %arg1 : i32 to index
    %2 = memref.load %arg3[%0, %1] : memref<2x2xi32, #tpu.memory_space<smem>>
    %c0_i32 = arith.constant 0 : i32
    return %arg0, %2 : i32, i32
  }
  func.func @transform_3(%arg0: i32, %arg1: i32, %arg2: memref<2x2xi32, #tpu.memory_space<smem>>, %arg3: memref<2x2xi32, #tpu.memory_space<smem>>) -> (i32, i32) {
    %0 = arith.index_cast %arg0 : i32 to index
    %1 = arith.index_cast %arg1 : i32 to index
    %2 = memref.load %arg3[%0, %1] : memref<2x2xi32, #tpu.memory_space<smem>>
    %c0_i32 = arith.constant 0 : i32
    %c0_i32_0 = arith.constant 0 : i32
    return %2, %c0_i32 : i32, i32
  }
  func.func @transform_4(%arg0: i32, %arg1: i32, %arg2: memref<2x2xi32, #tpu.memory_space<smem>>, %arg3: memref<2x2xi32, #tpu.memory_space<smem>>) -> (i32, i32) {
    %c0_i32 = arith.constant 0 : i32
    %c0_i32_0 = arith.constant 0 : i32
    return %arg0, %c0_i32 : i32, i32
  }
  func.func @transform_5(%arg0: i32, %arg1: i32, %arg2: memref<2x2xi32, #tpu.memory_space<smem>>, %arg3: memref<2x2xi32, #tpu.memory_space<smem>>) -> (i32, i32) {
    %c0_i32 = arith.constant 0 : i32
    %c0_i32_0 = arith.constant 0 : i32
    return %arg0, %c0_i32 : i32, i32
  }
}

module attributes {stable_mosaic.version = 11 : i64} {
  func.func @_linear_logsoftmax_kernel(%arg0: i32, %arg1: memref<128x32xf32, #tpu.memory_space<vmem>>, %arg2: memref<32x8xf32, #tpu.memory_space<vmem>>, %arg3: memref<1x8xf32, #tpu.memory_space<vmem>>, %arg4: memref<128x8xf32, #tpu.memory_space<vmem>>) attributes {dimension_semantics = [#tpu.dimension_semantics<parallel>], iteration_bounds = array<i64: 2>, scalar_prefetch = 0 : i64, scratch_operands = 0 : i64, tpu.core_type = #tpu.core_type<tc>, window_params = [{transform_indices = @transform_0, window_bounds = array<i64: 128, 32>}, {pipeline_mode = #tpu.pipeline_mode<synchronous>, transform_indices = @transform_1, window_bounds = array<i64: 32, 8>}, {pipeline_mode = #tpu.pipeline_mode<synchronous>, transform_indices = @transform_2, window_bounds = array<i64: 1, 8>}, {transform_indices = @transform_3, window_bounds = array<i64: 128, 8>}]} {
    %c0 = arith.constant 0 : index
    %c0_0 = arith.constant 0 : index
    %0 = vector.load %arg1[%c0, %c0_0] : memref<128x32xf32, #tpu.memory_space<vmem>>, vector<128x32xf32>
    %c0_1 = arith.constant 0 : index
    %c0_2 = arith.constant 0 : index
    %1 = vector.load %arg2[%c0_1, %c0_2] : memref<32x8xf32, #tpu.memory_space<vmem>>, vector<32x8xf32>
    %cst = arith.constant dense<0.000000e+00> : vector<128x8xf32>
    %2 = tpu.matmul %0, %1, %cst {dimension_numbers = #tpu.dot_dimension_numbers<[1], [0], [0], [1], [0, 0, 1, 1], [], []>} : vector<128x32xf32>, vector<32x8xf32>, vector<128x8xf32> -> vector<128x8xf32>
    %c0_3 = arith.constant 0 : index
    %c0_4 = arith.constant 0 : index
    %3 = vector.load %arg3[%c0_3, %c0_4] : memref<1x8xf32, #tpu.memory_space<vmem>>, vector<1x8xf32>
    %4 = vector.broadcast %3 : vector<1x8xf32> to vector<128x8xf32>
    %5 = arith.addf %2, %4 : vector<128x8xf32>
    %cst_5 = arith.constant dense<0xFF800000> : vector<128xf32>
    %6 = vector.multi_reduction <maximumf>, %5, %cst_5 [1] : vector<128x8xf32> to vector<128xf32>
    %7 = vector.shape_cast %6 : vector<128xf32> to vector<128x1xf32>
    %8 = vector.broadcast %7 : vector<128x1xf32> to vector<128x8xf32>
    %9 = arith.subf %5, %8 : vector<128x8xf32>
    %10 = math.exp %9 : vector<128x8xf32>
    %cst_6 = arith.constant dense<0.000000e+00> : vector<128xf32>
    %11 = vector.multi_reduction <add>, %10, %cst_6 [1] : vector<128x8xf32> to vector<128xf32>
    %12 = vector.shape_cast %11 : vector<128xf32> to vector<128x1xf32>
    %13 = math.log %12 : vector<128x1xf32>
    %14 = vector.broadcast %13 : vector<128x1xf32> to vector<128x8xf32>
    %15 = arith.subf %9, %14 : vector<128x8xf32>
    %c0_7 = arith.constant 0 : index
    %c0_8 = arith.constant 0 : index
    %16 = vector.load %arg4[%c0_7, %c0_8] : memref<128x8xf32, #tpu.memory_space<vmem>>, vector<128x8xf32>
    tpu.vector_store %arg4[%c0_7, %c0_8], %15 {strides = array<i32>} : memref<128x8xf32, #tpu.memory_space<vmem>>, vector<128x8xf32>,
    return
  }
  func.func @transform_0(%arg0: i32) -> (i32, i32) {
    %c0_i32 = arith.constant 0 : i32
    %c0_i32_0 = arith.constant 0 : i32
    return %arg0, %c0_i32 : i32, i32
  }
  func.func @transform_1(%arg0: i32) -> (i32, i32) {
    %c0_i32 = arith.constant 0 : i32
    %c0_i32_0 = arith.constant 0 : i32
    %c0_i32_1 = arith.constant 0 : i32
    return %c0_i32, %c0_i32_0 : i32, i32
  }
  func.func @transform_2(%arg0: i32) -> (i32, i32) {
    %c0_i32 = arith.constant 0 : i32
    %c0_i32_0 = arith.constant 0 : i32
    %c0_i32_1 = arith.constant 0 : i32
    return %c0_i32, %c0_i32_0 : i32, i32
  }
  func.func @transform_3(%arg0: i32) -> (i32, i32) {
    %c0_i32 = arith.constant 0 : i32
    %c0_i32_0 = arith.constant 0 : i32
    return %arg0, %c0_i32 : i32, i32
  }
}

</mosaic_0001>

<llo_original>
// kernel: squeeze.5
$region0: #{squeeze.5}
  #allocation0 [shape = 's32[1]{0}', space=sflag, size = 0x4, scoped, tag = 'scoped memory for squeeze.5']
  %s0 = inlined_call_operand.vmem [shape: bf16[256], index: 0, kind: input, shape index: {}]
  %s1 = inlined_call_operand.vmem [shape: bf16[1,256], index: 1, kind: output, shape index: {}]
  // Predicated region
  $region2: #{squeeze.5} parent=0 // pred_check
    _
  $region3: #{squeeze.5} parent=0 // pred_check_branch
    %3 = sbr.rel (0) target = $region5
  $region4: #{squeeze.5} parent=0 // pred_region
    _
  $region5: #{squeeze.5} parent=0 // pred_fallthru
    _
  %v4 = vld [vmem:[%s0] ss:$0 sm:$0xff]
  %v5 = vunpack.i.l.bf16 %v4
  %v7 = vunpack.i.h.bf16 %v4
  %v9 = vpack.c.bf16 0.0, %v5
  %10 = vst [vmem:[%s1] sm:$0x1] %v9
  %v11 = vld [vmem:[%s0] ss:$0 sm:$0xff]
  %v12 = vunpack.i.l.bf16 %v11
  %v14 = vunpack.i.h.bf16 %v11
  %s16 = scalar_lea.vmem %s1, 1
  %v17 = vpack.c.bf16 0.0, %v14
  %18 = vst [vmem:[%s16] sm:$0x1] %v17

// kernel: fagcn_forward.4
$region0: #{fagcn_forward.4}
  #allocation0 [shape = 'u32[]', space=smem, size = 0x4, offset = 0x4, fixed_abs, tag = 'smem constant byte address 0x4 - core index']
  #allocation1 [shape = 'u32[144,128]{1,0:T(1,128)}', space=vmem, size = 0x12000, scoped, tag = 'internal scratch']
  %s0 = inlined_call_operand.vmem [shape: f32[256,16], index: 0, kind: input, shape index: {}]
  %s1 = inlined_call_operand.vmem [shape: f32[16,32], index: 1, kind: input, shape index: {}]
  %s2 = inlined_call_operand.vmem [shape: f32[1,32], index: 2, kind: input, shape index: {}]
  %s3 = inlined_call_operand.vmem [shape: f32[256,32], index: 3, kind: output, shape index: {}]
  %s4 = sld [smem:[#allocation0]]
  $region45: #{fagcn_forward.4} parent=0
    _
  %s6 = ssub.s32 1, %s4
  %s7 = scalar_select 0, %s6, %s4
  loop: start=0, step=1, limit=4
  $region2: #{fagcn_forward.4} parent=0 // loop_pre_header
    _
  $region3: #{fagcn_forward.4} parent=0 // loop_header
    %s9 = sphi 0, %s13
    %p10 = scmp.ge.s32.totalorder %s9, 4
    %s19 = sphi 0, %s21
    %s22 = sphi 0, %s19
    %s23 = sphi 0, %s22
    %s39 = sphi 0, %s23
    %s43 = sphi 0, %s43
    %s45 = sphi 0, %s43
    %s46 = sphi 0, %s45
    %s60 = sphi 0, %s46
    %s64 = sphi 0, %s64
    %s66 = sphi 0, %s64
    %s67 = sphi 0, %s66
    %s81 = sphi 0, %s67
    %s87 = sphi 0, %s89
    %s90 = sphi 0, %s87
    %s91 = sphi 0, %s90
    %s107 = sphi 0, %s91
  $region4: #{fagcn_forward.4} parent=0 // loop_header_branch
    %12 = sbr.rel (%p10) target = $region8
  $region5: #{fagcn_forward.4} parent=0 // loop_body
    %s14 = ssub.s32 %s9, 1
    %s15 = ssub.s32 %s9, 2
    %s16 = sadd.s32 %s9, 1
    %s17 = ssub.s32 %s9, %s16
    %p18 = scmp.eq.s32.totalorder %s17, 0
    %s20 = sadd.s32 %s19, 1
    %s21 = scalar_select %p18, %s19, %s20
    %p24 = pneg %p18
    %p25 = scmp.eq.s32.totalorder %s9, 1
    %p26 = por %p24, %p25
    %p27 = scmp.ne.s32.totalorder %s19, %s22
    %p28 = scmp.eq.s32.totalorder %s9, 0
    %p29 = por %p27, %p28
    %p30 = scmp.ne.s32.totalorder %s19, %s22
    %p31 = scmp.eq.s32.totalorder %s14, 1
    %p32 = por %p30, %p31
    %p33 = scmp.ne.s32.totalorder %s22, %s23
    %p34 = scmp.eq.s32.totalorder %s14, 0
    %p35 = por %p33, %p34
    %p36 = scmp.ne.s32.totalorder %s22, %s23
    %p37 = scmp.eq.s32.totalorder %s15, 1
    %p38 = por %p36, %p37
    %p40 = scmp.ne.s32.totalorder %s23, %s39
    %p41 = scmp.eq.s32.totalorder %s15, 0
    %p42 = por %p40, %p41
    %s44 = sadd.s32 %s43, 1
    %p47 = scmp.eq.s32.totalorder %s9, 1
    %p48 = scmp.ne.s32.totalorder %s43, %s45
    %p49 = scmp.eq.s32.totalorder %s9, 0
    %p50 = por %p48, %p49
    %p51 = scmp.ne.s32.totalorder %s43, %s45
    %p52 = scmp.eq.s32.totalorder %s14, 1
    %p53 = por %p51, %p52
    %p54 = scmp.ne.s32.totalorder %s45, %s46
    %p55 = scmp.eq.s32.totalorder %s14, 0
    %p56 = por %p54, %p55
    %p57 = scmp.ne.s32.totalorder %s45, %s46
    %p58 = scmp.eq.s32.totalorder %s15, 1
    %p59 = por %p57, %p58
    %p61 = scmp.ne.s32.totalorder %s46, %s60
    %p62 = scmp.eq.s32.totalorder %s15, 0
    %p63 = por %p61, %p62
    %s65 = sadd.s32 %s64, 1
    %p68 = scmp.eq.s32.totalorder %s9, 1
    %p69 = scmp.ne.s32.totalorder %s64, %s66
    %p70 = scmp.eq.s32.totalorder %s9, 0
    %p71 = por %p69, %p70
    %p72 = scmp.ne.s32.totalorder %s64, %s66
    %p73 = scmp.eq.s32.totalorder %s14, 1
    %p74 = por %p72, %p73
    %p75 = scmp.ne.s32.totalorder %s66, %s67
    %p76 = scmp.eq.s32.totalorder %s14, 0
    %p77 = por %p75, %p76
    %p78 = scmp.ne.s32.totalorder %s66, %s67
    %p79 = scmp.eq.s32.totalorder %s15, 1
    %p80 = por %p78, %p79
    %p82 = scmp.ne.s32.totalorder %s67, %s81
    %p83 = scmp.eq.s32.totalorder %s15, 0
    %p84 = por %p82, %p83
    %s85 = ssub.s32 %s9, %s16
    %p86 = scmp.eq.s32.totalorder %s85, 0
    %s88 = sadd.s32 %s87, 1
    %s89 = scalar_select %p86, %s87, %s88
    %p92 = pneg %p86
    %p93 = scmp.eq.s32.totalorder %s9, 1
    %p94 = por %p92, %p93
    %p95 = scmp.ne.s32.totalorder %s87, %s90
    %p96 = scmp.eq.s32.totalorder %s9, 0
    %p97 = por %p95, %p96
    %p98 = scmp.ne.s32.totalorder %s87, %s90
    %p99 = scmp.eq.s32.totalorder %s14, 1
    %p100 = por %p98, %p99
    %p101 = scmp.ne.s32.totalorder %s90, %s91
    %p102 = scmp.eq.s32.totalorder %s14, 0
    %p103 = por %p101, %p102
    %p104 = scmp.ne.s32.totalorder %s90, %s91
    %p105 = scmp.eq.s32.totalorder %s15, 1
    %p106 = por %p104, %p105
    %p108 = scmp.ne.s32.totalorder %s91, %s107
    %p109 = scmp.eq.s32.totalorder %s15, 0
    %p110 = por %p108, %p109
    %p111 = scmp.le.s32.totalorder 1, %s9
    %p112 = scmp.lt.s32.totalorder %s9, 3
    %p113 = pnand %p111, %p112
    %p114 = pneg %p113
    // Predicated region
    $region9: #{fagcn_forward.4} parent=5 // pred_check
      _
    $region10: #{fagcn_forward.4} parent=5 // pred_check_branch
      %116 = sbr.rel (%p113) target = $region12
    $region11: #{fagcn_forward.4} parent=5 // pred_region
      %s117 = ssub.s32 %s9, 1
      // Predicated region
      $region13: #{fagcn_forward.4} parent=11 // pred_check
        %p118 = pneg %p56
      $region14: #{fagcn_forward.4} parent=11 // pred_check_branch
        %120 = sbr.rel (%p118) target = $region16
      $region15: #{fagcn_forward.4} parent=11 // pred_region
        _
      $region16: #{fagcn_forward.4} parent=11 // pred_fallthru
        _
      // Predicated region
      $region17: #{fagcn_forward.4} parent=11 // pred_check
        %p121 = pneg %p77
      $region18: #{fagcn_forward.4} parent=11 // pred_check_branch
        %123 = sbr.rel (%p121) target = $region20
      $region19: #{fagcn_forward.4} parent=11 // pred_region
        _
      $region20: #{fagcn_forward.4} parent=11 // pred_fallthru
        _
    $region12: #{fagcn_forward.4} parent=5 // pred_fallthru
      _
    %p124 = scmp.lt.s32.totalorder %s9, 2
    // Predicated region
    $region21: #{fagcn_forward.4} parent=5 // pred_check
      %p125 = pneg %p124
    $region22: #{fagcn_forward.4} parent=5 // pred_check_branch
      %127 = sbr.rel (%p125) target = $region24
    $region23: #{fagcn_forward.4} parent=5 // pred_region
      // Predicated region
      $region25: #{fagcn_forward.4} parent=23 // pred_check
        %p128 = pneg %p29
      $region26: #{fagcn_forward.4} parent=23 // pred_check_branch
        %130 = sbr.rel (%p128) target = $region28
      $region27: #{fagcn_forward.4} parent=23 // pred_region
        %s131 = smul.u32 16, %s9
        %p132 = scmp.lt.s32.totalorder %s131, 31
        %s133 = scalar_select %p132, %s131, 31
        %s134 = smul.addr %s133, 8
        %s135 = scalar_lea.vmem %s0, %s134
        %s136 = smul.u32 16, %s9
      $region28: #{fagcn_forward.4} parent=23 // pred_fallthru
        _
    $region24: #{fagcn_forward.4} parent=5 // pred_fallthru
      _
    %p137 = scmp.le.s32.totalorder 1, %s9
    %p138 = scmp.lt.s32.totalorder %s9, 3
    %p139 = pnand %p137, %p138
    %p140 = pneg %p139
    // Predicated region
    $region29: #{fagcn_forward.4} parent=5 // pred_check
      _
    $region30: #{fagcn_forward.4} parent=5 // pred_check_branch
      %142 = sbr.rel (%p139) target = $region32
    $region31: #{fagcn_forward.4} parent=5 // pred_region
      %s143 = ssub.s32 %s9, 1
      %s144 = smul.u32 16, %s14
      %p145 = scmp.lt.s32.totalorder %s144, 31
      %s146 = scalar_select %p145, %s144, 31
      %s147 = smul.addr %s146, 8
      %s148 = scalar_lea.vmem %s0, %s147
      %p149 = pneg %p35
      %p150 = pneg %p32
      %p151 = pneg %p56
      %p152 = pneg %p53
      %p153 = pneg %p77
      %p154 = pneg %p74
      %p155 = pneg %p103
      %p156 = pneg %p100
      %s157 = smul.u32 16, %s14
      %p158 = scmp.lt.s32.totalorder %s157, 31
      %s159 = scalar_select %p158, %s157, 31
      %s160 = smul.addr %s159, 8
      %s161 = scalar_lea.vmem %s3, %s160
      %s162 = smul.u32 16, %s14
      %p163 = scmp.lt.s32.totalorder %s162, 31
      %s164 = scalar_select %p163, %s162, 31
      %s165 = smul.addr %s164, 8
      %s166 = scalar_lea.vmem %s0, %s165
      %s167 = smul.u32 16, %s14
      %s168 = smul.u32 16, %s14
      %p169 = scmp.lt.s32.totalorder %s168, 31
      %s170 = scalar_select %p169, %s168, 31
      %s171 = smul.addr %s170, 8
      %s172 = scalar_lea.vmem %s3, %s171
      %s173 = smul.u32 16, %s14
      %v174 = vld [vmem:[%s166] sm:$0xff]
      %v175 = vld [vmem:[%s166 + $0x8] sm:$0xff]
      %v176 = vld [vmem:[%s166 + $0x10] sm:$0xff]
      %v177 = vld [vmem:[%s166 + $0x18] sm:$0xff]
      %v178 = vld [vmem:[%s166 + $0x20] sm:$0xff]
      %v179 = vld [vmem:[%s166 + $0x28] sm:$0xff]
      %v180 = vld [vmem:[%s166 + $0x30] sm:$0xff]
      %v181 = vld [vmem:[%s166 + $0x38] sm:$0xff]
      %v182 = vld [vmem:[%s166 + $0x40] sm:$0xff]
      %v183 = vld [vmem:[%s166 + $0x48] sm:$0xff]
      %v184 = vld [vmem:[%s166 + $0x50] sm:$0xff]
      %v185 = vld [vmem:[%s166 + $0x58] sm:$0xff]
      %v186 = vld [vmem:[%s166 + $0x60] sm:$0xff]
      %v187 = vld [vmem:[%s166 + $0x68] sm:$0xff]
      %v188 = vld [vmem:[%s166 + $0x70] sm:$0xff]
      %v189 = vld [vmem:[%s166 + $0x78] sm:$0xff]
      %v190 = vld [vmem:[%s1] sm:$0xff]
      %v191 = vld [vmem:[%s1 + $0x8] sm:$0xff]
      %v192 = vld [vmem:[%s2] sm:$0x1]
      %v194 = vlaneseq
      %v195 = vshrl.u32 %v194, 7
      %v196 = vsub.s32 0, %v195
      %v197 = vrot.slane %v192, %v196
      %vm199 = vcmask 130048
      %v201 = vsel %vm199, %v174, 0
      %v204 = vsel %vm199, %v175, 0
      %v207 = vsel %vm199, %v176, 0
      %v210 = vsel %vm199, %v177, 0
      %v213 = vsel %vm199, %v178, 0
      %v216 = vsel %vm199, %v179, 0
      %v219 = vsel %vm199, %v180, 0
      %v222 = vsel %vm199, %v181, 0
      %v225 = vsel %vm199, %v182, 0
      %v228 = vsel %vm199, %v183, 0
      %v231 = vsel %vm199, %v184, 0
      %v234 = vsel %vm199, %v185, 0
      %v237 = vsel %vm199, %v186, 0
      %v240 = vsel %vm199, %v187, 0
      %v243 = vsel %vm199, %v188, 0
      %v246 = vsel %vm199, %v189, 0
      %248 = vmatprep.subr.mxu0 0.0
      %249 = vmatpush1.msra.mxu0 %v190
      %250 = vmatprep.subr.mxu0 0.0
      %251 = vmatpush1.msra.mxu0 %v191
      %252 = vmatprep.subr.mxu0 0.0
      %253 = vmatpush1.msra.mxu0 0.0
      %254 = vmatprep.subr.mxu0 0.0
      %255 = vmatpush1.msra.mxu0 0.0
      %256 = vmatprep.subr.mxu0 0.0
      %257 = vmatpush1.msra.mxu0 0.0
      %258 = vmatprep.subr.mxu0 0.0
      %259 = vmatpush1.msra.mxu0 0.0
      %260 = vmatprep.subr.mxu0 0.0
      %261 = vmatpush1.msra.mxu0 0.0
      %262 = vmatprep.subr.mxu0 0.0
      %263 = vmatpush1.msra.mxu0 0.0
      %264 = vmatprep.subr.mxu0 0.0
      %265 = vmatpush1.msra.mxu0 0.0
      %266 = vmatprep.subr.mxu0 0.0
      %267 = vmatpush1.msra.mxu0 0.0
      %268 = vmatprep.subr.mxu0 0.0
      %269 = vmatpush1.msra.mxu0 0.0
      %270 = vmatprep.subr.mxu0 0.0
      %271 = vmatpush1.msra.mxu0 0.0
      %272 = vmatprep.subr.mxu0 0.0
      %273 = vmatpush1.msra.mxu0 0.0
      %274 = vmatprep.subr.mxu0 0.0
      %275 = vmatpush1.msra.mxu0 0.0
      %276 = vmatprep.subr.mxu0 0.0
      %277 = vmatpush1.msra.mxu0 0.0
      %278 = vmatprep.subr.mxu0 0.0
      %279 = vmatpush1.msra.mxu0 0.0
      %280 = vmatprep.subr.mxu0 0.0
      %281 = vmatpush1.msra.mxu0 0.0
      %282 = vmatprep.subr.mxu0 0.0
      %283 = vmatpush1.msra.mxu0 0.0
      %284 = vmatprep.subr.mxu0 0.0
      %285 = vmatpush1.msra.mxu0 0.0
      %286 = vmatprep.subr.mxu0 0.0
      %287 = vmatpush1.msra.mxu0 0.0
      %288 = vmatprep.subr.mxu0 0.0
      %289 = vmatpush1.msra.mxu0 0.0
      %290 = vmatprep.subr.mxu0 0.0
      %291 = vmatpush1.msra.mxu0 0.0
      %292 = vmatprep.subr.mxu0 0.0
      %293 = vmatpush1.msra.mxu0 0.0
      %294 = vmatprep.subr.mxu0 0.0
      %295 = vmatpush1.msra.mxu0 0.0
      %296 = vmatprep.subr.mxu0 0.0
      %297 = vmatpush1.msra.mxu0 0.0
      %298 = vmatprep.subr.mxu0 0.0
      %299 = vmatpush1.msra.mxu0 0.0
      %300 = vmatprep.subr.mxu0 0.0
      %301 = vmatpush1.msra.mxu0 0.0
      %302 = vmatprep.subr.mxu0 0.0
      %303 = vmatpush1.msra.mxu0 0.0
      %304 = vmatprep.subr.mxu0 0.0
      %305 = vmatpush1.msra.mxu0 0.0
      %306 = vmatprep.subr.mxu0 0.0
      %307 = vmatpush1.msra.mxu0 0.0
      %308 = vmatprep.subr.mxu0 0.0
      %309 = vmatpush1.msra.mxu0 0.0
      %310 = vmatprep.subr.mxu0 0.0
      %311 = vmatpush1.msra.mxu0 0.0
      %312 = vmatprep.mubr.f32.mxu0 0.0
      %313 = vmatmul.mubr.f32.gmra.mrb[0].mxu0 %v201
      %v314 = vpop.f32.mrb[0].mxu0
      %v315 = vadd.f32 %v197, %v314
      %v316 = vpop.f32.mrb[0].mxu0
      %317 = vmatprep.mubr.f32.mxu0 0.0
      %318 = vmatmul.mubr.f32.gmra.mrb[0].mxu0 %v204
      %v319 = vpop.f32.mrb[0].mxu0
      %v320 = vadd.f32 %v197, %v319
      %v321 = vpop.f32.mrb[0].mxu0
      %322 = vmatprep.mubr.f32.mxu0 0.0
      %323 = vmatmul.mubr.f32.gmra.mrb[0].mxu0 %v207
      %v324 = vpop.f32.mrb[0].mxu0
      %v325 = vadd.f32 %v197, %v324
      %v326 = vpop.f32.mrb[0].mxu0
      %327 = vmatprep.mubr.f32.mxu0 0.0
      %328 = vmatmul.mubr.f32.gmra.mrb[0].mxu0 %v210
      %v329 = vpop.f32.mrb[0].mxu0
      %v330 = vadd.f32 %v197, %v329
      %v331 = vpop.f32.mrb[0].mxu0
      %332 = vmatprep.mubr.f32.mxu0 0.0
      %333 = vmatmul.mubr.f32.gmra.mrb[0].mxu0 %v213
      %v334 = vpop.f32.mrb[0].mxu0
      %v335 = vadd.f32 %v197, %v334
      %v336 = vpop.f32.mrb[0].mxu0
      %337 = vmatprep.mubr.f32.mxu0 0.0
      %338 = vmatmul.mubr.f32.gmra.mrb[0].mxu0 %v216
      %v339 = vpop.f32.mrb[0].mxu0
      %v340 = vadd.f32 %v197, %v339
      %v341 = vpop.f32.mrb[0].mxu0
      %342 = vmatprep.mubr.f32.mxu0 0.0
      %343 = vmatmul.mubr.f32.gmra.mrb[0].mxu0 %v219
      %v344 = vpop.f32.mrb[0].mxu0
      %v345 = vadd.f32 %v197, %v344
      %v346 = vpop.f32.mrb[0].mxu0
      %347 = vmatprep.mubr.f32.mxu0 0.0
      %348 = vmatmul.mubr.f32.gmra.mrb[0].mxu0 %v222
      %v349 = vpop.f32.mrb[0].mxu0
      %v350 = vadd.f32 %v197, %v349
      %v351 = vpop.f32.mrb[0].mxu0
      %352 = vmatprep.mubr.f32.mxu0 0.0
      %353 = vmatmul.mubr.f32.gmra.mrb[0].mxu0 %v225
      %v354 = vpop.f32.mrb[0].mxu0
      %v355 = vadd.f32 %v197, %v354
      %v356 = vpop.f32.mrb[0].mxu0
      %357 = vmatprep.mubr.f32.mxu0 0.0
      %358 = vmatmul.mubr.f32.gmra.mrb[0].mxu0 %v228
      %v359 = vpop.f32.mrb[0].mxu0
      %v360 = vadd.f32 %v197, %v359
      %v361 = vpop.f32.mrb[0].mxu0
      %362 = vmatprep.mubr.f32.mxu0 0.0
      %363 = vmatmul.mubr.f32.gmra.mrb[0].mxu0 %v231
      %v364 = vpop.f32.mrb[0].mxu0
      %v365 = vadd.f32 %v197, %v364
      %v366 = vpop.f32.mrb[0].mxu0
      %367 = vmatprep.mubr.f32.mxu0 0.0
      %368 = vmatmul.mubr.f32.gmra.mrb[0].mxu0 %v234
      %v369 = vpop.f32.mrb[0].mxu0
      %v370 = vadd.f32 %v197, %v369
      %v371 = vpop.f32.mrb[0].mxu0
      %372 = vmatprep.mubr.f32.mxu0 0.0
      %373 = vmatmul.mubr.f32.gmra.mrb[0].mxu0 %v237
      %v374 = vpop.f32.mrb[0].mxu0
      %v375 = vadd.f32 %v197, %v374
      %v376 = vpop.f32.mrb[0].mxu0
      %377 = vmatprep.mubr.f32.mxu0 0.0
      %378 = vmatmul.mubr.f32.gmra.mrb[0].mxu0 %v240
      %v379 = vpop.f32.mrb[0].mxu0
      %v380 = vadd.f32 %v197, %v379
      %v381 = vpop.f32.mrb[0].mxu0
      %382 = vmatprep.mubr.f32.mxu0 0.0
      %383 = vmatmul.mubr.f32.gmra.mrb[0].mxu0 %v243
      %v384 = vpop.f32.mrb[0].mxu0
      %v385 = vadd.f32 %v197, %v384
      %v386 = vpop.f32.mrb[0].mxu0
      %387 = vmatprep.mubr.f32.mxu0 0.0
      %388 = vmatmul.mubr.f32.gmra.mrb[0].mxu0 %v246
      %v389 = vpop.f32.mrb[0].mxu0
      %v390 = vadd.f32 %v197, %v389
      %v391 = vpop.f32.mrb[0].mxu0
      %392 = vdwg.mxu0
      %v393 = vmax.f32 %v315, 0.0
      %v394 = vmax.f32 %v320, 0.0
      %v395 = vmax.f32 %v325, 0.0
      %v396 = vmax.f32 %v330, 0.0
      %v397 = vmax.f32 %v335, 0.0
      %v398 = vmax.f32 %v340, 0.0
      %v399 = vmax.f32 %v345, 0.0
      %v400 = vmax.f32 %v350, 0.0
      %v401 = vmax.f32 %v355, 0.0
      %v402 = vmax.f32 %v360, 0.0
      %v403 = vmax.f32 %v365, 0.0
      %v404 = vmax.f32 %v370, 0.0
      %v405 = vmax.f32 %v375, 0.0
      %v406 = vmax.f32 %v380, 0.0
      %v407 = vmax.f32 %v385, 0.0
      %v408 = vmax.f32 %v390, 0.0
      %vm409 = vcmask 261120
      %410 = vst.msk [vmem:[%s172] sm:$0xff] %vm409, %v393
      %411 = vst.msk [vmem:[%s172 + $0x8] sm:$0xff] %vm409, %v394
      %412 = vst.msk [vmem:[%s172 + $0x10] sm:$0xff] %vm409, %v395
      %413 = vst.msk [vmem:[%s172 + $0x18] sm:$0xff] %vm409, %v396
      %414 = vst.msk [vmem:[%s172 + $0x20] sm:$0xff] %vm409, %v397
      %415 = vst.msk [vmem:[%s172 + $0x28] sm:$0xff] %vm409, %v398
      %416 = vst.msk [vmem:[%s172 + $0x30] sm:$0xff] %vm409, %v399
      %417 = vst.msk [vmem:[%s172 + $0x38] sm:$0xff] %vm409, %v400
      %418 = vst.msk [vmem:[%s172 + $0x40] sm:$0xff] %vm409, %v401
      %419 = vst.msk [vmem:[%s172 + $0x48] sm:$0xff] %vm409, %v402
      %420 = vst.msk [vmem:[%s172 + $0x50] sm:$0xff] %vm409, %v403
      %421 = vst.msk [vmem:[%s172 + $0x58] sm:$0xff] %vm409, %v404
      %422 = vst.msk [vmem:[%s172 + $0x60] sm:$0xff] %vm409, %v405
      %423 = vst.msk [vmem:[%s172 + $0x68] sm:$0xff] %vm409, %v406
      %424 = vst.msk [vmem:[%s172 + $0x70] sm:$0xff] %vm409, %v407
      %425 = vst.msk [vmem:[%s172 + $0x78] sm:$0xff] %vm409, %v408
      %s426 = smul.u32 16, %s14
      %p427 = scmp.lt.s32.totalorder %s426, 31
      %s428 = scalar_select %p427, %s426, 31
      %s429 = smul.addr %s428, 8
      %s430 = scalar_lea.vmem %s3, %s429
      // Predicated region
      $region33: #{fagcn_forward.4} parent=31 // pred_check
        %p431 = pneg %p100
      $region34: #{fagcn_forward.4} parent=31 // pred_check_branch
        %433 = sbr.rel (%p431) target = $region36
      $region35: #{fagcn_forward.4} parent=31 // pred_region
        %s434 = smul.u32 16, %s14
      $region36: #{fagcn_forward.4} parent=31 // pred_fallthru
        _
    $region32: #{fagcn_forward.4} parent=5 // pred_fallthru
      _
    %p435 = scmp.le.s32.totalorder 2, %s9
    // Predicated region
    $region37: #{fagcn_forward.4} parent=5 // pred_check
      %p436 = pneg %p435
    $region38: #{fagcn_forward.4} parent=5 // pred_check_branch
      %438 = sbr.rel (%p436) target = $region40
    $region39: #{fagcn_forward.4} parent=5 // pred_region
      %s439 = ssub.s32 %s9, 2
      // Predicated region
      $region41: #{fagcn_forward.4} parent=39 // pred_check
        %p440 = pneg %p106
      $region42: #{fagcn_forward.4} parent=39 // pred_check_branch
        %442 = sbr.rel (%p440) target = $region44
      $region43: #{fagcn_forward.4} parent=39 // pred_region
        %s443 = smul.u32 16, %s15
        %p444 = scmp.lt.s32.totalorder %s443, 31
        %s445 = scalar_select %p444, %s443, 31
        %s446 = smul.addr %s445, 8
        %s447 = scalar_lea.vmem %s3, %s446
      $region44: #{fagcn_forward.4} parent=39 // pred_fallthru
        _
    $region40: #{fagcn_forward.4} parent=5 // pred_fallthru
      _
  $region6: #{fagcn_forward.4} parent=0 // loop_footer
    %s13 = sadd.s32 1, %s9
  $region7: #{fagcn_forward.4} parent=0 // loop_footer_branch
    %8 = sbr.rel target = $region3
  $region8: #{fagcn_forward.4} parent=0 // loop_exit
    _

// kernel: fagcn_forward.7
$region0: #{fagcn_forward.7}
  #allocation0 [shape = 'u32[]', space=smem, size = 0x4, offset = 0x4, fixed_abs, tag = 'smem constant byte address 0x4 - core index']
  #allocation1 [shape = 'u32[144,128]{1,0:T(1,128)}', space=vmem, size = 0x12000, scoped, tag = 'internal scratch']
  %s0 = inlined_call_operand.vmem [shape: f32[256,32], index: 0, kind: input, shape index: {}]
  %s1 = inlined_call_operand.vmem [shape: f32[32,8], index: 1, kind: input, shape index: {}]
  %s2 = inlined_call_operand.vmem [shape: f32[1,8], index: 2, kind: input, shape index: {}]
  %s3 = inlined_call_operand.vmem [shape: f32[256,8], index: 3, kind: output, shape index: {}]
  %s4 = sld [smem:[#allocation0]]
  $region45: #{fagcn_forward.7} parent=0
    _
  %s6 = ssub.s32 1, %s4
  %s7 = scalar_select 0, %s6, %s4
  loop: start=0, step=1, limit=4
  $region2: #{fagcn_forward.7} parent=0 // loop_pre_header
    _
  $region3: #{fagcn_forward.7} parent=0 // loop_header
    %s9 = sphi 0, %s13
    %p10 = scmp.ge.s32.totalorder %s9, 4
    %s19 = sphi 0, %s21
    %s22 = sphi 0, %s19
    %s23 = sphi 0, %s22
    %s39 = sphi 0, %s23
    %s43 = sphi 0, %s43
    %s45 = sphi 0, %s43
    %s46 = sphi 0, %s45
    %s60 = sphi 0, %s46
    %s64 = sphi 0, %s64
    %s66 = sphi 0, %s64
    %s67 = sphi 0, %s66
    %s81 = sphi 0, %s67
    %s87 = sphi 0, %s89
    %s90 = sphi 0, %s87
    %s91 = sphi 0, %s90
    %s107 = sphi 0, %s91
  $region4: #{fagcn_forward.7} parent=0 // loop_header_branch
    %12 = sbr.rel (%p10) target = $region8
  $region5: #{fagcn_forward.7} parent=0 // loop_body
    %s14 = ssub.s32 %s9, 1
    %s15 = ssub.s32 %s9, 2
    %s16 = sadd.s32 %s9, 1
    %s17 = ssub.s32 %s9, %s16
    %p18 = scmp.eq.s32.totalorder %s17, 0
    %s20 = sadd.s32 %s19, 1
    %s21 = scalar_select %p18, %s19, %s20
    %p24 = pneg %p18
    %p25 = scmp.eq.s32.totalorder %s9, 1
    %p26 = por %p24, %p25
    %p27 = scmp.ne.s32.totalorder %s19, %s22
    %p28 = scmp.eq.s32.totalorder %s9, 0
    %p29 = por %p27, %p28
    %p30 = scmp.ne.s32.totalorder %s19, %s22
    %p31 = scmp.eq.s32.totalorder %s14, 1
    %p32 = por %p30, %p31
    %p33 = scmp.ne.s32.totalorder %s22, %s23
    %p34 = scmp.eq.s32.totalorder %s14, 0
    %p35 = por %p33, %p34
    %p36 = scmp.ne.s32.totalorder %s22, %s23
    %p37 = scmp.eq.s32.totalorder %s15, 1
    %p38 = por %p36, %p37
    %p40 = scmp.ne.s32.totalorder %s23, %s39
    %p41 = scmp.eq.s32.totalorder %s15, 0
    %p42 = por %p40, %p41
    %s44 = sadd.s32 %s43, 1
    %p47 = scmp.eq.s32.totalorder %s9, 1
    %p48 = scmp.ne.s32.totalorder %s43, %s45
    %p49 = scmp.eq.s32.totalorder %s9, 0
    %p50 = por %p48, %p49
    %p51 = scmp.ne.s32.totalorder %s43, %s45
    %p52 = scmp.eq.s32.totalorder %s14, 1
    %p53 = por %p51, %p52
    %p54 = scmp.ne.s32.totalorder %s45, %s46
    %p55 = scmp.eq.s32.totalorder %s14, 0
    %p56 = por %p54, %p55
    %p57 = scmp.ne.s32.totalorder %s45, %s46
    %p58 = scmp.eq.s32.totalorder %s15, 1
    %p59 = por %p57, %p58
    %p61 = scmp.ne.s32.totalorder %s46, %s60
    %p62 = scmp.eq.s32.totalorder %s15, 0
    %p63 = por %p61, %p62
    %s65 = sadd.s32 %s64, 1
    %p68 = scmp.eq.s32.totalorder %s9, 1
    %p69 = scmp.ne.s32.totalorder %s64, %s66
    %p70 = scmp.eq.s32.totalorder %s9, 0
    %p71 = por %p69, %p70
    %p72 = scmp.ne.s32.totalorder %s64, %s66
    %p73 = scmp.eq.s32.totalorder %s14, 1
    %p74 = por %p72, %p73
    %p75 = scmp.ne.s32.totalorder %s66, %s67
    %p76 = scmp.eq.s32.totalorder %s14, 0
    %p77 = por %p75, %p76
    %p78 = scmp.ne.s32.totalorder %s66, %s67
    %p79 = scmp.eq.s32.totalorder %s15, 1
    %p80 = por %p78, %p79
    %p82 = scmp.ne.s32.totalorder %s67, %s81
    %p83 = scmp.eq.s32.totalorder %s15, 0
    %p84 = por %p82, %p83
    %s85 = ssub.s32 %s9, %s16
    %p86 = scmp.eq.s32.totalorder %s85, 0
    %s88 = sadd.s32 %s87, 1
    %s89 = scalar_select %p86, %s87, %s88
    %p92 = pneg %p86
    %p93 = scmp.eq.s32.totalorder %s9, 1
    %p94 = por %p92, %p93
    %p95 = scmp.ne.s32.totalorder %s87, %s90
    %p96 = scmp.eq.s32.totalorder %s9, 0
    %p97 = por %p95, %p96
    %p98 = scmp.ne.s32.totalorder %s87, %s90
    %p99 = scmp.eq.s32.totalorder %s14, 1
    %p100 = por %p98, %p99
    %p101 = scmp.ne.s32.totalorder %s90, %s91
    %p102 = scmp.eq.s32.totalorder %s14, 0
    %p103 = por %p101, %p102
    %p104 = scmp.ne.s32.totalorder %s90, %s91
    %p105 = scmp.eq.s32.totalorder %s15, 1
    %p106 = por %p104, %p105
    %p108 = scmp.ne.s32.totalorder %s91, %s107
    %p109 = scmp.eq.s32.totalorder %s15, 0
    %p110 = por %p108, %p109
    %p111 = scmp.le.s32.totalorder 1, %s9
    %p112 = scmp.lt.s32.totalorder %s9, 3
    %p113 = pnand %p111, %p112
    %p114 = pneg %p113
    // Predicated region
    $region9: #{fagcn_forward.7} parent=5 // pred_check
      _
    $region10: #{fagcn_forward.7} parent=5 // pred_check_branch
      %116 = sbr.rel (%p113) target = $region12
    $region11: #{fagcn_forward.7} parent=5 // pred_region
      %s117 = ssub.s32 %s9, 1
      // Predicated region
      $region13: #{fagcn_forward.7} parent=11 // pred_check
        %p118 = pneg %p56
      $region14: #{fagcn_forward.7} parent=11 // pred_check_branch
        %120 = sbr.rel (%p118) target = $region16
      $region15: #{fagcn_forward.7} parent=11 // pred_region
        _
      $region16: #{fagcn_forward.7} parent=11 // pred_fallthru
        _
      // Predicated region
      $region17: #{fagcn_forward.7} parent=11 // pred_check
        %p121 = pneg %p77
      $region18: #{fagcn_forward.7} parent=11 // pred_check_branch
        %123 = sbr.rel (%p121) target = $region20
      $region19: #{fagcn_forward.7} parent=11 // pred_region
        _
      $region20: #{fagcn_forward.7} parent=11 // pred_fallthru
        _
    $region12: #{fagcn_forward.7} parent=5 // pred_fallthru
      _
    %p124 = scmp.lt.s32.totalorder %s9, 2
    // Predicated region
    $region21: #{fagcn_forward.7} parent=5 // pred_check
      %p125 = pneg %p124
    $region22: #{fagcn_forward.7} parent=5 // pred_check_branch
      %127 = sbr.rel (%p125) target = $region24
    $region23: #{fagcn_forward.7} parent=5 // pred_region
      // Predicated region
      $region25: #{fagcn_forward.7} parent=23 // pred_check
        %p128 = pneg %p29
      $region26: #{fagcn_forward.7} parent=23 // pred_check_branch
        %130 = sbr.rel (%p128) target = $region28
      $region27: #{fagcn_forward.7} parent=23 // pred_region
        %s131 = smul.u32 16, %s9
        %p132 = scmp.lt.s32.totalorder %s131, 31
        %s133 = scalar_select %p132, %s131, 31
        %s134 = smul.addr %s133, 8
        %s135 = scalar_lea.vmem %s0, %s134
        %s136 = smul.u32 16, %s9
      $region28: #{fagcn_forward.7} parent=23 // pred_fallthru
        _
    $region24: #{fagcn_forward.7} parent=5 // pred_fallthru
      _
    %p137 = scmp.le.s32.totalorder 1, %s9
    %p138 = scmp.lt.s32.totalorder %s9, 3
    %p139 = pnand %p137, %p138
    %p140 = pneg %p139
    // Predicated region
    $region29: #{fagcn_forward.7} parent=5 // pred_check
      _
    $region30: #{fagcn_forward.7} parent=5 // pred_check_branch
      %142 = sbr.rel (%p139) target = $region32
    $region31: #{fagcn_forward.7} parent=5 // pred_region
      %s143 = ssub.s32 %s9, 1
      %s144 = smul.u32 16, %s14
      %p145 = scmp.lt.s32.totalorder %s144, 31
      %s146 = scalar_select %p145, %s144, 31
      %s147 = smul.addr %s146, 8
      %s148 = scalar_lea.vmem %s0, %s147
      %p149 = pneg %p35
      %p150 = pneg %p32
      %p151 = pneg %p56
      %p152 = pneg %p53
      %p153 = pneg %p77
      %p154 = pneg %p74
      %p155 = pneg %p103
      %p156 = pneg %p100
      %s157 = smul.u32 16, %s14
      %p158 = scmp.lt.s32.totalorder %s157, 31
      %s159 = scalar_select %p158, %s157, 31
      %s160 = smul.addr %s159, 8
      %s161 = scalar_lea.vmem %s3, %s160
      %s162 = smul.u32 16, %s14
      %p163 = scmp.lt.s32.totalorder %s162, 31
      %s164 = scalar_select %p163, %s162, 31
      %s165 = smul.addr %s164, 8
      %s166 = scalar_lea.vmem %s0, %s165
      %s167 = smul.u32 16, %s14
      %s168 = smul.u32 16, %s14
      %p169 = scmp.lt.s32.totalorder %s168, 31
      %s170 = scalar_select %p169, %s168, 31
      %s171 = smul.addr %s170, 8
      %s172 = scalar_lea.vmem %s3, %s171
      %s173 = smul.u32 16, %s14
      %v174 = vld [vmem:[%s166] sm:$0xff]
      %v175 = vld [vmem:[%s166 + $0x8] sm:$0xff]
      %v176 = vld [vmem:[%s166 + $0x10] sm:$0xff]
      %v177 = vld [vmem:[%s166 + $0x18] sm:$0xff]
      %v178 = vld [vmem:[%s166 + $0x20] sm:$0xff]
      %v179 = vld [vmem:[%s166 + $0x28] sm:$0xff]
      %v180 = vld [vmem:[%s166 + $0x30] sm:$0xff]
      %v181 = vld [vmem:[%s166 + $0x38] sm:$0xff]
      %v182 = vld [vmem:[%s166 + $0x40] sm:$0xff]
      %v183 = vld [vmem:[%s166 + $0x48] sm:$0xff]
      %v184 = vld [vmem:[%s166 + $0x50] sm:$0xff]
      %v185 = vld [vmem:[%s166 + $0x58] sm:$0xff]
      %v186 = vld [vmem:[%s166 + $0x60] sm:$0xff]
      %v187 = vld [vmem:[%s166 + $0x68] sm:$0xff]
      %v188 = vld [vmem:[%s166 + $0x70] sm:$0xff]
      %v189 = vld [vmem:[%s166 + $0x78] sm:$0xff]
      %v190 = vld [vmem:[%s1] sm:$0xff]
      %v191 = vld [vmem:[%s1 + $0x8] sm:$0xff]
      %v192 = vld [vmem:[%s1 + $0x10] sm:$0xff]
      %v193 = vld [vmem:[%s1 + $0x18] sm:$0xff]
      %v194 = vld [vmem:[%s2] sm:$0x1]
      %v196 = vlaneseq
      %v197 = vshrl.u32 %v196, 7
      %v198 = vsub.s32 0, %v197
      %v199 = vrot.slane %v194, %v198
      %vm201 = vcmask 261120
      %v203 = vsel %vm201, %v174, 0
      %v206 = vsel %vm201, %v175, 0
      %v209 = vsel %vm201, %v176, 0
      %v212 = vsel %vm201, %v177, 0
      %v215 = vsel %vm201, %v178, 0
      %v218 = vsel %vm201, %v179, 0
      %v221 = vsel %vm201, %v180, 0
      %v224 = vsel %vm201, %v181, 0
      %v227 = vsel %vm201, %v182, 0
      %v230 = vsel %vm201, %v183, 0
      %v233 = vsel %vm201, %v184, 0
      %v236 = vsel %vm201, %v185, 0
      %v239 = vsel %vm201, %v186, 0
      %v242 = vsel %vm201, %v187, 0
      %v245 = vsel %vm201, %v188, 0
      %v248 = vsel %vm201, %v189, 0
      %250 = vmatprep.subr.mxu0 0.0
      %251 = vmatpush1.msra.mxu0 %v190
      %252 = vmatprep.subr.mxu0 0.0
      %253 = vmatpush1.msra.mxu0 %v191
      %254 = vmatprep.subr.mxu0 0.0
      %255 = vmatpush1.msra.mxu0 %v192
      %256 = vmatprep.subr.mxu0 0.0
      %257 = vmatpush1.msra.mxu0 %v193
      %258 = vmatprep.subr.mxu0 0.0
      %259 = vmatpush1.msra.mxu0 0.0
      %260 = vmatprep.subr.mxu0 0.0
      %261 = vmatpush1.msra.mxu0 0.0
      %262 = vmatprep.subr.mxu0 0.0
      %263 = vmatpush1.msra.mxu0 0.0
      %264 = vmatprep.subr.mxu0 0.0
      %265 = vmatpush1.msra.mxu0 0.0
      %266 = vmatprep.subr.mxu0 0.0
      %267 = vmatpush1.msra.mxu0 0.0
      %268 = vmatprep.subr.mxu0 0.0
      %269 = vmatpush1.msra.mxu0 0.0
      %270 = vmatprep.subr.mxu0 0.0
      %271 = vmatpush1.msra.mxu0 0.0
      %272 = vmatprep.subr.mxu0 0.0
      %273 = vmatpush1.msra.mxu0 0.0
      %274 = vmatprep.subr.mxu0 0.0
      %275 = vmatpush1.msra.mxu0 0.0
      %276 = vmatprep.subr.mxu0 0.0
      %277 = vmatpush1.msra.mxu0 0.0
      %278 = vmatprep.subr.mxu0 0.0
      %279 = vmatpush1.msra.mxu0 0.0
      %280 = vmatprep.subr.mxu0 0.0
      %281 = vmatpush1.msra.mxu0 0.0
      %282 = vmatprep.subr.mxu0 0.0
      %283 = vmatpush1.msra.mxu0 0.0
      %284 = vmatprep.subr.mxu0 0.0
      %285 = vmatpush1.msra.mxu0 0.0
      %286 = vmatprep.subr.mxu0 0.0
      %287 = vmatpush1.msra.mxu0 0.0
      %288 = vmatprep.subr.mxu0 0.0
      %289 = vmatpush1.msra.mxu0 0.0
      %290 = vmatprep.subr.mxu0 0.0
      %291 = vmatpush1.msra.mxu0 0.0
      %292 = vmatprep.subr.mxu0 0.0
      %293 = vmatpush1.msra.mxu0 0.0
      %294 = vmatprep.subr.mxu0 0.0
      %295 = vmatpush1.msra.mxu0 0.0
      %296 = vmatprep.subr.mxu0 0.0
      %297 = vmatpush1.msra.mxu0 0.0
      %298 = vmatprep.subr.mxu0 0.0
      %299 = vmatpush1.msra.mxu0 0.0
      %300 = vmatprep.subr.mxu0 0.0
      %301 = vmatpush1.msra.mxu0 0.0
      %302 = vmatprep.subr.mxu0 0.0
      %303 = vmatpush1.msra.mxu0 0.0
      %304 = vmatprep.subr.mxu0 0.0
      %305 = vmatpush1.msra.mxu0 0.0
      %306 = vmatprep.subr.mxu0 0.0
      %307 = vmatpush1.msra.mxu0 0.0
      %308 = vmatprep.subr.mxu0 0.0
      %309 = vmatpush1.msra.mxu0 0.0
      %310 = vmatprep.subr.mxu0 0.0
      %311 = vmatpush1.msra.mxu0 0.0
      %312 = vmatprep.subr.mxu0 0.0
      %313 = vmatpush1.msra.mxu0 0.0
      %314 = vmatprep.mubr.f32.mxu0 0.0
      %315 = vmatmul.mubr.f32.gmra.mrb[0].mxu0 %v203
      %v316 = vpop.f32.mrb[0].mxu0
      %v317 = vadd.f32 %v199, %v316
      %v318 = vpop.f32.mrb[0].mxu0
      %319 = vmatprep.mubr.f32.mxu0 0.0
      %320 = vmatmul.mubr.f32.gmra.mrb[0].mxu0 %v206
      %v321 = vpop.f32.mrb[0].mxu0
      %v322 = vadd.f32 %v199, %v321
      %v323 = vpop.f32.mrb[0].mxu0
      %324 = vmatprep.mubr.f32.mxu0 0.0
      %325 = vmatmul.mubr.f32.gmra.mrb[0].mxu0 %v209
      %v326 = vpop.f32.mrb[0].mxu0
      %v327 = vadd.f32 %v199, %v326
      %v328 = vpop.f32.mrb[0].mxu0
      %329 = vmatprep.mubr.f32.mxu0 0.0
      %330 = vmatmul.mubr.f32.gmra.mrb[0].mxu0 %v212
      %v331 = vpop.f32.mrb[0].mxu0
      %v332 = vadd.f32 %v199, %v331
      %v333 = vpop.f32.mrb[0].mxu0
      %334 = vmatprep.mubr.f32.mxu0 0.0
      %335 = vmatmul.mubr.f32.gmra.mrb[0].mxu0 %v215
      %v336 = vpop.f32.mrb[0].mxu0
      %v337 = vadd.f32 %v199, %v336
      %v338 = vpop.f32.mrb[0].mxu0
      %339 = vmatprep.mubr.f32.mxu0 0.0
      %340 = vmatmul.mubr.f32.gmra.mrb[0].mxu0 %v218
      %v341 = vpop.f32.mrb[0].mxu0
      %v342 = vadd.f32 %v199, %v341
      %v343 = vpop.f32.mrb[0].mxu0
      %344 = vmatprep.mubr.f32.mxu0 0.0
      %345 = vmatmul.mubr.f32.gmra.mrb[0].mxu0 %v221
      %v346 = vpop.f32.mrb[0].mxu0
      %v347 = vadd.f32 %v199, %v346
      %v348 = vpop.f32.mrb[0].mxu0
      %349 = vmatprep.mubr.f32.mxu0 0.0
      %350 = vmatmul.mubr.f32.gmra.mrb[0].mxu0 %v224
      %v351 = vpop.f32.mrb[0].mxu0
      %v352 = vadd.f32 %v199, %v351
      %v353 = vpop.f32.mrb[0].mxu0
      %354 = vmatprep.mubr.f32.mxu0 0.0
      %355 = vmatmul.mubr.f32.gmra.mrb[0].mxu0 %v227
      %v356 = vpop.f32.mrb[0].mxu0
      %v357 = vadd.f32 %v199, %v356
      %v358 = vpop.f32.mrb[0].mxu0
      %359 = vmatprep.mubr.f32.mxu0 0.0
      %360 = vmatmul.mubr.f32.gmra.mrb[0].mxu0 %v230
      %v361 = vpop.f32.mrb[0].mxu0
      %v362 = vadd.f32 %v199, %v361
      %v363 = vpop.f32.mrb[0].mxu0
      %364 = vmatprep.mubr.f32.mxu0 0.0
      %365 = vmatmul.mubr.f32.gmra.mrb[0].mxu0 %v233
      %v366 = vpop.f32.mrb[0].mxu0
      %v367 = vadd.f32 %v199, %v366
      %v368 = vpop.f32.mrb[0].mxu0
      %369 = vmatprep.mubr.f32.mxu0 0.0
      %370 = vmatmul.mubr.f32.gmra.mrb[0].mxu0 %v236
      %v371 = vpop.f32.mrb[0].mxu0
      %v372 = vadd.f32 %v199, %v371
      %v373 = vpop.f32.mrb[0].mxu0
      %374 = vmatprep.mubr.f32.mxu0 0.0
      %375 = vmatmul.mubr.f32.gmra.mrb[0].mxu0 %v239
      %v376 = vpop.f32.mrb[0].mxu0
      %v377 = vadd.f32 %v199, %v376
      %v378 = vpop.f32.mrb[0].mxu0
      %379 = vmatprep.mubr.f32.mxu0 0.0
      %380 = vmatmul.mubr.f32.gmra.mrb[0].mxu0 %v242
      %v381 = vpop.f32.mrb[0].mxu0
      %v382 = vadd.f32 %v199, %v381
      %v383 = vpop.f32.mrb[0].mxu0
      %384 = vmatprep.mubr.f32.mxu0 0.0
      %385 = vmatmul.mubr.f32.gmra.mrb[0].mxu0 %v245
      %v386 = vpop.f32.mrb[0].mxu0
      %v387 = vadd.f32 %v199, %v386
      %v388 = vpop.f32.mrb[0].mxu0
      %389 = vmatprep.mubr.f32.mxu0 0.0
      %390 = vmatmul.mubr.f32.gmra.mrb[0].mxu0 %v248
      %v391 = vpop.f32.mrb[0].mxu0
      %v392 = vadd.f32 %v199, %v391
      %v393 = vpop.f32.mrb[0].mxu0
      %394 = vdwg.mxu0
      %vm395 = vcmask 64512
      %v396 = vsel %vm395, %v317, -inf
      %397 = vmax.xlane.f32.xlu0 %v396
      %v398 = vpop.xlane.xlu0 %397
      %v399 = vsel %vm395, %v322, -inf
      %400 = vmax.xlane.f32.xlu0 %v399
      %v401 = vpop.xlane.xlu0 %400
      %v402 = vsel %vm395, %v327, -inf
      %403 = vmax.xlane.f32.xlu0 %v402
      %v404 = vpop.xlane.xlu0 %403
      %v405 = vsel %vm395, %v332, -inf
      %406 = vmax.xlane.f32.xlu0 %v405
      %v407 = vpop.xlane.xlu0 %406
      %v408 = vsel %vm395, %v337, -inf
      %409 = vmax.xlane.f32.xlu0 %v408
      %v410 = vpop.xlane.xlu0 %409
      %v411 = vsel %vm395, %v342, -inf
      %412 = vmax.xlane.f32.xlu0 %v411
      %v413 = vpop.xlane.xlu0 %412
      %v414 = vsel %vm395, %v347, -inf
      %415 = vmax.xlane.f32.xlu0 %v414
      %v416 = vpop.xlane.xlu0 %415
      %v417 = vsel %vm395, %v352, -inf
      %418 = vmax.xlane.f32.xlu0 %v417
      %v419 = vpop.xlane.xlu0 %418
      %v420 = vsel %vm395, %v357, -inf
      %421 = vmax.xlane.f32.xlu0 %v420
      %v422 = vpop.xlane.xlu0 %421
      %v423 = vsel %vm395, %v362, -inf
      %424 = vmax.xlane.f32.xlu0 %v423
      %v425 = vpop.xlane.xlu0 %424
      %v426 = vsel %vm395, %v367, -inf
      %427 = vmax.xlane.f32.xlu0 %v426
      %v428 = vpop.xlane.xlu0 %427
      %v429 = vsel %vm395, %v372, -inf
      %430 = vmax.xlane.f32.xlu0 %v429
      %v431 = vpop.xlane.xlu0 %430
      %v432 = vsel %vm395, %v377, -inf
      %433 = vmax.xlane.f32.xlu0 %v432
      %v434 = vpop.xlane.xlu0 %433
      %v435 = vsel %vm395, %v382, -inf
      %436 = vmax.xlane.f32.xlu0 %v435
      %v437 = vpop.xlane.xlu0 %436
      %v438 = vsel %vm395, %v387, -inf
      %439 = vmax.xlane.f32.xlu0 %v438
      %v440 = vpop.xlane.xlu0 %439
      %v441 = vsel %vm395, %v392, -inf
      %442 = vmax.xlane.f32.xlu0 %v441
      %v443 = vpop.xlane.xlu0 %442
      %v444 = vsub.f32 %v317, %v398
      %v445 = vsub.f32 %v322, %v401
      %v446 = vsub.f32 %v327, %v404
      %v447 = vsub.f32 %v332, %v407
      %v448 = vsub.f32 %v337, %v410
      %v449 = vsub.f32 %v342, %v413
      %v450 = vsub.f32 %v347, %v416
      %v451 = vsub.f32 %v352, %v419
      %v452 = vsub.f32 %v357, %v422
      %v453 = vsub.f32 %v362, %v425
      %v454 = vsub.f32 %v367, %v428
      %v455 = vsub.f32 %v372, %v431
      %v456 = vsub.f32 %v377, %v434
      %v457 = vsub.f32 %v382, %v437
      %v458 = vsub.f32 %v387, %v440
      %v459 = vsub.f32 %v392, %v443
      %v460 = vmul.f32 %v444, 1.442695
      %v461 = vpow.pop %v460
      %v462 = vmul.f32 %v445, 1.442695
      %v463 = vpow.pop %v462
      %v464 = vmul.f32 %v446, 1.442695
      %v465 = vpow.pop %v464
      %v466 = vmul.f32 %v447, 1.442695
      %v467 = vpow.pop %v466
      %v468 = vmul.f32 %v448, 1.442695
      %v469 = vpow.pop %v468
      %v470 = vmul.f32 %v449, 1.442695
      %v471 = vpow.pop %v470
      %v472 = vmul.f32 %v450, 1.442695
      %v473 = vpow.pop %v472
      %v474 = vmul.f32 %v451, 1.442695
      %v475 = vpow.pop %v474
      %v476 = vmul.f32 %v452, 1.442695
      %v477 = vpow.pop %v476
      %v478 = vmul.f32 %v453, 1.442695
      %v479 = vpow.pop %v478
      %v480 = vmul.f32 %v454, 1.442695
      %v481 = vpow.pop %v480
      %v482 = vmul.f32 %v455, 1.442695
      %v483 = vpow.pop %v482
      %v484 = vmul.f32 %v456, 1.442695
      %v485 = vpow.pop %v484
      %v486 = vmul.f32 %v457, 1.442695
      %v487 = vpow.pop %v486
      %v488 = vmul.f32 %v458, 1.442695
      %v489 = vpow.pop %v488
      %v490 = vmul.f32 %v459, 1.442695
      %v491 = vpow.pop %v490
      %v492 = vsel %vm395, %v461, 0.0
      %493 = vadd.xlane.f32.xlu0 %v492
      %v494 = vpop.xlane.xlu0 %493
      %v495 = vsel %vm395, %v463, 0.0
      %496 = vadd.xlane.f32.xlu0 %v495
      %v497 = vpop.xlane.xlu0 %496
      %v498 = vsel %vm395, %v465, 0.0
      %499 = vadd.xlane.f32.xlu0 %v498
      %v500 = vpop.xlane.xlu0 %499
      %v501 = vsel %vm395, %v467, 0.0
      %502 = vadd.xlane.f32.xlu0 %v501
      %v503 = vpop.xlane.xlu0 %502
      %v504 = vsel %vm395, %v469, 0.0
      %505 = vadd.xlane.f32.xlu0 %v504
      %v506 = vpop.xlane.xlu0 %505
      %v507 = vsel %vm395, %v471, 0.0
      %508 = vadd.xlane.f32.xlu0 %v507
      %v509 = vpop.xlane.xlu0 %508
      %v510 = vsel %vm395, %v473, 0.0
      %511 = vadd.xlane.f32.xlu0 %v510
      %v512 = vpop.xlane.xlu0 %511
      %v513 = vsel %vm395, %v475, 0.0
      %514 = vadd.xlane.f32.xlu0 %v513
      %v515 = vpop.xlane.xlu0 %514
      %v516 = vsel %vm395, %v477, 0.0
      %517 = vadd.xlane.f32.xlu0 %v516
      %v518 = vpop.xlane.xlu0 %517
      %v519 = vsel %vm395, %v479, 0.0
      %520 = vadd.xlane.f32.xlu0 %v519
      %v521 = vpop.xlane.xlu0 %520
      %v522 = vsel %vm395, %v481, 0.0
      %523 = vadd.xlane.f32.xlu0 %v522
      %v524 = vpop.xlane.xlu0 %523
      %v525 = vsel %vm395, %v483, 0.0
      %526 = vadd.xlane.f32.xlu0 %v525
      %v527 = vpop.xlane.xlu0 %526
      %v528 = vsel %vm395, %v485, 0.0
      %529 = vadd.xlane.f32.xlu0 %v528
      %v530 = vpop.xlane.xlu0 %529
      %v531 = vsel %vm395, %v487, 0.0
      %532 = vadd.xlane.f32.xlu0 %v531
      %v533 = vpop.xlane.xlu0 %532
      %v534 = vsel %vm395, %v489, 0.0
      %535 = vadd.xlane.f32.xlu0 %v534
      %v536 = vpop.xlane.xlu0 %535
      %v537 = vsel %vm395, %v491, 0.0
      %538 = vadd.xlane.f32.xlu0 %v537
      %v539 = vpop.xlane.xlu0 %538
      %v540 = vlog2.pop %v494
      %v541 = vmul.f32 %v540, 0.6931472
      %v542 = vlog2.pop %v497
      %v543 = vmul.f32 %v542, 0.6931472
      %v544 = vlog2.pop %v500
      %v545 = vmul.f32 %v544, 0.6931472
      %v546 = vlog2.pop %v503
      %v547 = vmul.f32 %v546, 0.6931472
      %v548 = vlog2.pop %v506
      %v549 = vmul.f32 %v548, 0.6931472
      %v550 = vlog2.pop %v509
      %v551 = vmul.f32 %v550, 0.6931472
      %v552 = vlog2.pop %v512
      %v553 = vmul.f32 %v552, 0.6931472
      %v554 = vlog2.pop %v515
      %v555 = vmul.f32 %v554, 0.6931472
      %v556 = vlog2.pop %v518
      %v557 = vmul.f32 %v556, 0.6931472
      %v558 = vlog2.pop %v521
      %v559 = vmul.f32 %v558, 0.6931472
      %v560 = vlog2.pop %v524
      %v561 = vmul.f32 %v560, 0.6931472
      %v562 = vlog2.pop %v527
      %v563 = vmul.f32 %v562, 0.6931472
      %v564 = vlog2.pop %v530
      %v565 = vmul.f32 %v564, 0.6931472
      %v566 = vlog2.pop %v533
      %v567 = vmul.f32 %v566, 0.6931472
      %v568 = vlog2.pop %v536
      %v569 = vmul.f32 %v568, 0.6931472
      %v570 = vlog2.pop %v539
      %v571 = vmul.f32 %v570, 0.6931472
      %v572 = vsub.f32 %v444, %v541
      %v573 = vsub.f32 %v445, %v543
      %v574 = vsub.f32 %v446, %v545
      %v575 = vsub.f32 %v447, %v547
      %v576 = vsub.f32 %v448, %v549
      %v577 = vsub.f32 %v449, %v551
      %v578 = vsub.f32 %v450, %v553
      %v579 = vsub.f32 %v451, %v555
      %v580 = vsub.f32 %v452, %v557
      %v581 = vsub.f32 %v453, %v559
      %v582 = vsub.f32 %v454, %v561
      %v583 = vsub.f32 %v455, %v563
      %v584 = vsub.f32 %v456, %v565
      %v585 = vsub.f32 %v457, %v567
      %v586 = vsub.f32 %v458, %v569
      %v587 = vsub.f32 %v459, %v571
      %588 = vst.msk [vmem:[%s172] sm:$0xff] %vm395, %v572
      %589 = vst.msk [vmem:[%s172 + $0x8] sm:$0xff] %vm395, %v573
      %590 = vst.msk [vmem:[%s172 + $0x10] sm:$0xff] %vm395, %v574
      %591 = vst.msk [vmem:[%s172 + $0x18] sm:$0xff] %vm395, %v575
      %592 = vst.msk [vmem:[%s172 + $0x20] sm:$0xff] %vm395, %v576
      %593 = vst.msk [vmem:[%s172 + $0x28] sm:$0xff] %vm395, %v577
      %594 = vst.msk [vmem:[%s172 + $0x30] sm:$0xff] %vm395, %v578
      %595 = vst.msk [vmem:[%s172 + $0x38] sm:$0xff] %vm395, %v579
      %596 = vst.msk [vmem:[%s172 + $0x40] sm:$0xff] %vm395, %v580
      %597 = vst.msk [vmem:[%s172 + $0x48] sm:$0xff] %vm395, %v581
      %598 = vst.msk [vmem:[%s172 + $0x50] sm:$0xff] %vm395, %v582
      %599 = vst.msk [vmem:[%s172 + $0x58] sm:$0xff] %vm395, %v583
      %600 = vst.msk [vmem:[%s172 + $0x60] sm:$0xff] %vm395, %v584
      %601 = vst.msk [vmem:[%s172 + $0x68] sm:$0xff] %vm395, %v585
      %602 = vst.msk [vmem:[%s172 + $0x70] sm:$0xff] %vm395, %v586
      %603 = vst.msk [vmem:[%s172 + $0x78] sm:$0xff] %vm395, %v587
      %s604 = smul.u32 16, %s14
      %p605 = scmp.lt.s32.totalorder %s604, 31
      %s606 = scalar_select %p605, %s604, 31
      %s607 = smul.addr %s606, 8
      %s608 = scalar_lea.vmem %s3, %s607
      // Predicated region
      $region33: #{fagcn_forward.7} parent=31 // pred_check
        %p609 = pneg %p100
      $region34: #{fagcn_forward.7} parent=31 // pred_check_branch
        %611 = sbr.rel (%p609) target = $region36
      $region35: #{fagcn_forward.7} parent=31 // pred_region
        %s612 = smul.u32 16, %s14
      $region36: #{fagcn_forward.7} parent=31 // pred_fallthru
        _
    $region32: #{fagcn_forward.7} parent=5 // pred_fallthru
      _
    %p613 = scmp.le.s32.totalorder 2, %s9
    // Predicated region
    $region37: #{fagcn_forward.7} parent=5 // pred_check
      %p614 = pneg %p613
    $region38: #{fagcn_forward.7} parent=5 // pred_check_branch
      %616 = sbr.rel (%p614) target = $region40
    $region39: #{fagcn_forward.7} parent=5 // pred_region
      %s617 = ssub.s32 %s9, 2
      // Predicated region
      $region41: #{fagcn_forward.7} parent=39 // pred_check
        %p618 = pneg %p106
      $region42: #{fagcn_forward.7} parent=39 // pred_check_branch
        %620 = sbr.rel (%p618) target = $region44
      $region43: #{fagcn_forward.7} parent=39 // pred_region
        %s621 = smul.u32 16, %s15
        %p622 = scmp.lt.s32.totalorder %s621, 31
        %s623 = scalar_select %p622, %s621, 31
        %s624 = smul.addr %s623, 8
        %s625 = scalar_lea.vmem %s3, %s624
      $region44: #{fagcn_forward.7} parent=39 // pred_fallthru
        _
    $region40: #{fagcn_forward.7} parent=5 // pred_fallthru
      _
  $region6: #{fagcn_forward.7} parent=0 // loop_footer
    %s13 = sadd.s32 1, %s9
  $region7: #{fagcn_forward.7} parent=0 // loop_footer_branch
    %8 = sbr.rel target = $region3
  $region8: #{fagcn_forward.7} parent=0 // loop_exit
    _

// kernel: fagcn_forward.5
$region0: #{fagcn_forward.5}
  #allocation0 [shape = 'u32[]', space=smem, size = 0x4, offset = 0x4, fixed_abs, tag = 'smem constant byte address 0x4 - core index']
  #allocation1 [shape = 'u32[144,128]{1,0:T(1,128)}', space=vmem, size = 0x12000, scoped, tag = 'internal scratch']
  #allocation2 [shape = 'f32[128,32]{1,0:T(8,128)}', space=vmem, size = 0x10000, scoped, tag = 'scratch operand']
  #allocation3 [shape = 's32[1]{0}', space=sflag, size = 0x4, scoped, tag = 'scoped memory for fagcn_forward.5']
  #allocation4 [shape = 'u8[1024]{0}', space=smem, size = 0x400, scoped, tag = 'prefetched SMEM operand 0']
  #allocation5 [shape = 'u8[1024]{0}', space=smem, size = 0x400, scoped, tag = 'prefetched SMEM operand 1']
  %s0 = inlined_call_operand.vmem [shape: s32[2,2], index: 0, kind: input, shape index: {}]
  %s1 = inlined_call_operand.vmem [shape: s32[2,2], index: 1, kind: input, shape index: {}]
  %s2 = inlined_call_operand.vmem [shape: bf16[1,256], index: 2, kind: input, shape index: {}]
  %s3 = inlined_call_operand.vmem [shape: bf16[256,1], index: 3, kind: input, shape index: {}]
  %s4 = inlined_call_operand.vmem [shape: bf16[256,256], index: 4, kind: input, shape index: {}]
  %s5 = inlined_call_operand.vmem [shape: bf16[256,32], index: 5, kind: input, shape index: {}]
  %s6 = inlined_call_operand.vmem [shape: f32[256,32], index: 6, kind: input, shape index: {}]
  %s7 = inlined_call_operand.vmem [shape: f32[256,32], index: 7, kind: output, shape index: {}]
  %s8 = sld [smem:[#allocation0]]
  $region106: #{fagcn_forward.5} parent=0
    _
  %s10 = ssub.s32 1, %s8
  %s11 = scalar_select 0, %s10, %s8
  %s12 = sshll.u32 %s0, 4
  %s13 = int_to_ptr.vmem [resolvable:$true] %s12
  %15 = dma.vmem_to_smem %s13, 32, [#allocation4], [#allocation3]
  %s16 = sshll.u32 %s1, 4
  %s17 = int_to_ptr.vmem [resolvable:$true] %s16
  %19 = dma.vmem_to_smem %s17, 32, [#allocation5], [#allocation3]
  %20 = dma.done [#allocation3], 64
  %21 = sfence
  $region1: #{fagcn_forward.5} parent=0
    #allocation6 [shape = 'u8[65536]{0}', space=vmem, size = 0x10000, scoped, tag = 'input window, operand 4']
    loop: start=0, step=1, limit=6
    $region2: #{fagcn_forward.5} parent=1 // loop_pre_header
      _
    $region3: #{fagcn_forward.5} parent=1 // loop_header
      %s23 = sphi 0, %s27
      %p24 = scmp.ge.s32.totalorder %s23, 6
      %s30 = sphi 0, %s42
      %s31 = sphi 0, %s38
      %s32 = sphi 0, %s30
      %s33 = sphi 0, %s31
      %s34 = sphi 0, %s32
      %s35 = sphi 0, %s33
      %s61 = sphi 0, %s63
      %s64 = sphi 0, %s61
      %s65 = sphi 0, %s64
      %s81 = sphi 0, %s65
      %s87 = sphi 0, %s89
      %s90 = sphi 0, %s87
      %s91 = sphi 0, %s90
      %s107 = sphi 0, %s91
      %s131 = sphi 0, %s133
      %s134 = sphi 0, %s131
      %s135 = sphi 0, %s134
      %s151 = sphi 0, %s135
      %s173 = sphi 0, %s175
      %s176 = sphi 0, %s173
      %s177 = sphi 0, %s176
      %s193 = sphi 0, %s177
      %s199 = sphi 0, %s201
      %s202 = sphi 0, %s199
      %s203 = sphi 0, %s202
      %s219 = sphi 0, %s203
      %s225 = sphi 0, %s227
      %s228 = sphi 0, %s225
      %s229 = sphi 0, %s228
      %s245 = sphi 0, %s229
    $region4: #{fagcn_forward.5} parent=1 // loop_header_branch
      %26 = sbr.rel (%p24) target = $region8
    $region5: #{fagcn_forward.5} parent=1 // loop_body
      %s28 = ssub.s32 %s23, 1
      %s29 = ssub.s32 %s23, 2
      %s36 = sadd.s32 1, %s31
      %p37 = scmp.ge.s32.totalorder %s36, 2
      %s38 = scalar_select %p37, 0, %s36
      %s39 = sadd.s32 1, %s30
      %s40 = scalar_select %p37, %s39, %s30
      %p41 = scmp.ge.s32.totalorder %s40, 2
      %s42 = scalar_select %p41, 0, %s40
      %s43 = sshra.s32 %s31, 7
      %s44 = sand.u32 %s31, 127
      %s45 = sadd.s32 %s43, %s30
      %s46 = smul.u32 %s45, 128
      %s47 = sshra.s32 %s31, 7
      %s48 = sand.u32 %s31, 127
      %s49 = sadd.s32 %s46, %s48
      %s50 = sld [smem:[#allocation5 + %s49]]
      %s51 = sshra.s32 %s38, 7
      %s52 = sand.u32 %s38, 127
      %s53 = sadd.s32 %s51, %s42
      %s54 = smul.u32 %s53, 128
      %s55 = sshra.s32 %s38, 7
      %s56 = sand.u32 %s38, 127
      %s57 = sadd.s32 %s54, %s56
      %s58 = sld [smem:[#allocation5 + %s57]]
      %s59 = ssub.s32 %s50, %s58
      %p60 = scmp.eq.s32.totalorder %s59, 0
      %s62 = sadd.s32 %s61, 1
      %s63 = scalar_select %p60, %s61, %s62
      %p66 = pneg %p60
      %p67 = scmp.eq.s32.totalorder %s23, 3
      %p68 = por %p66, %p67
      %p69 = scmp.ne.s32.totalorder %s61, %s64
      %p70 = scmp.eq.s32.totalorder %s23, 0
      %p71 = por %p69, %p70
      %p72 = scmp.ne.s32.totalorder %s61, %s64
      %p73 = scmp.eq.s32.totalorder %s28, 3
      %p74 = por %p72, %p73
      %p75 = scmp.ne.s32.totalorder %s64, %s65
      %p76 = scmp.eq.s32.totalorder %s28, 0
      %p77 = por %p75, %p76
      %p78 = scmp.ne.s32.totalorder %s64, %s65
      %p79 = scmp.eq.s32.totalorder %s29, 3
      %p80 = por %p78, %p79
      %p82 = scmp.ne.s32.totalorder %s65, %s81
      %p83 = scmp.eq.s32.totalorder %s29, 0
      %p84 = por %p82, %p83
      %s85 = ssub.s32 %s30, %s42
      %p86 = scmp.eq.s32.totalorder %s85, 0
      %s88 = sadd.s32 %s87, 1
      %s89 = scalar_select %p86, %s87, %s88
      %p92 = pneg %p86
      %p93 = scmp.eq.s32.totalorder %s23, 3
      %p94 = por %p92, %p93
      %p95 = scmp.ne.s32.totalorder %s87, %s90
      %p96 = scmp.eq.s32.totalorder %s23, 0
      %p97 = por %p95, %p96
      %p98 = scmp.ne.s32.totalorder %s87, %s90
      %p99 = scmp.eq.s32.totalorder %s28, 3
      %p100 = por %p98, %p99
      %p101 = scmp.ne.s32.totalorder %s90, %s91
      %p102 = scmp.eq.s32.totalorder %s28, 0
      %p103 = por %p101, %p102
      %p104 = scmp.ne.s32.totalorder %s90, %s91
      %p105 = scmp.eq.s32.totalorder %s29, 3
      %p106 = por %p104, %p105
      %p108 = scmp.ne.s32.totalorder %s91, %s107
      %p109 = scmp.eq.s32.totalorder %s29, 0
      %p110 = por %p108, %p109
      %s111 = sshra.s32 %s31, 7
      %s112 = sand.u32 %s31, 127
      %s113 = sadd.s32 %s111, %s30
      %s114 = smul.u32 %s113, 128
      %s115 = sshra.s32 %s31, 7
      %s116 = sand.u32 %s31, 127
      %s117 = sadd.s32 %s114, %s116
      %s118 = sld [smem:[#allocation5 + %s117]]
      %s119 = sshra.s32 %s38, 7
      %s120 = sand.u32 %s38, 127
      %s121 = sadd.s32 %s119, %s42
      %s122 = smul.u32 %s121, 128
      %s123 = sshra.s32 %s38, 7
      %s124 = sand.u32 %s38, 127
      %s125 = sadd.s32 %s122, %s124
      %s126 = sld [smem:[#allocation5 + %s125]]
      %s127 = ssub.s32 %s30, %s42
      %s128 = ssub.s32 %s118, %s126
      %s129 = sor.u32 %s127, %s128
      %p130 = scmp.eq.s32.totalorder %s129, 0
      %s132 = sadd.s32 %s131, 1
      %s133 = scalar_select %p130, %s131, %s132
      %p136 = pneg %p130
      %p137 = scmp.eq.s32.totalorder %s23, 3
      %p138 = por %p136, %p137
      %p139 = scmp.ne.s32.totalorder %s131, %s134
      %p140 = scmp.eq.s32.totalorder %s23, 0
      %p141 = por %p139, %p140
      %p142 = scmp.ne.s32.totalorder %s131, %s134
      %p143 = scmp.eq.s32.totalorder %s28, 3
      %p144 = por %p142, %p143
      %p145 = scmp.ne.s32.totalorder %s134, %s135
      %p146 = scmp.eq.s32.totalorder %s28, 0
      %p147 = por %p145, %p146
      %p148 = scmp.ne.s32.totalorder %s134, %s135
      %p149 = scmp.eq.s32.totalorder %s29, 3
      %p150 = por %p148, %p149
      %p152 = scmp.ne.s32.totalorder %s135, %s151
      %p153 = scmp.eq.s32.totalorder %s29, 0
      %p154 = por %p152, %p153
      %s155 = sshra.s32 %s31, 7
      %s156 = sand.u32 %s31, 127
      %s157 = sadd.s32 %s155, %s30
      %s158 = smul.u32 %s157, 128
      %s159 = sshra.s32 %s31, 7
      %s160 = sand.u32 %s31, 127
      %s161 = sadd.s32 %s158, %s160
      %s162 = sld [smem:[#allocation5 + %s161]]
      %s163 = sshra.s32 %s38, 7
      %s164 = sand.u32 %s38, 127
      %s165 = sadd.s32 %s163, %s42
      %s166 = smul.u32 %s165, 128
      %s167 = sshra.s32 %s38, 7
      %s168 = sand.u32 %s38, 127
      %s169 = sadd.s32 %s166, %s168
      %s170 = sld [smem:[#allocation5 + %s169]]
      %s171 = ssub.s32 %s162, %s170
      %p172 = scmp.eq.s32.totalorder %s171, 0
      %s174 = sadd.s32 %s173, 1
      %s175 = scalar_select %p172, %s173, %s174
      %p178 = pneg %p172
      %p179 = scmp.eq.s32.totalorder %s23, 3
      %p180 = por %p178, %p179
      %p181 = scmp.ne.s32.totalorder %s173, %s176
      %p182 = scmp.eq.s32.totalorder %s23, 0
      %p183 = por %p181, %p182
      %p184 = scmp.ne.s32.totalorder %s173, %s176
      %p185 = scmp.eq.s32.totalorder %s28, 3
      %p186 = por %p184, %p185
      %p187 = scmp.ne.s32.totalorder %s176, %s177
      %p188 = scmp.eq.s32.totalorder %s28, 0
      %p189 = por %p187, %p188
      %p190 = scmp.ne.s32.totalorder %s176, %s177
      %p191 = scmp.eq.s32.totalorder %s29, 3
      %p192 = por %p190, %p191
      %p194 = scmp.ne.s32.totalorder %s177, %s193
      %p195 = scmp.eq.s32.totalorder %s29, 0
      %p196 = por %p194, %p195
      %s197 = ssub.s32 %s30, %s42
      %p198 = scmp.eq.s32.totalorder %s197, 0
      %s200 = sadd.s32 %s199, 1
      %s201 = scalar_select %p198, %s199, %s200
      %p204 = pneg %p198
      %p205 = scmp.eq.s32.totalorder %s23, 3
      %p206 = por %p204, %p205
      %p207 = scmp.ne.s32.totalorder %s199, %s202
      %p208 = scmp.eq.s32.totalorder %s23, 0
      %p209 = por %p207, %p208
      %p210 = scmp.ne.s32.totalorder %s199, %s202
      %p211 = scmp.eq.s32.totalorder %s28, 3
      %p212 = por %p210, %p211
      %p213 = scmp.ne.s32.totalorder %s202, %s203
      %p214 = scmp.eq.s32.totalorder %s28, 0
      %p215 = por %p213, %p214
      %p216 = scmp.ne.s32.totalorder %s202, %s203
      %p217 = scmp.eq.s32.totalorder %s29, 3
      %p218 = por %p216, %p217
      %p220 = scmp.ne.s32.totalorder %s203, %s219
      %p221 = scmp.eq.s32.totalorder %s29, 0
      %p222 = por %p220, %p221
      %s223 = ssub.s32 %s30, %s42
      %p224 = scmp.eq.s32.totalorder %s223, 0
      %s226 = sadd.s32 %s225, 1
      %s227 = scalar_select %p224, %s225, %s226
      %p230 = pneg %p224
      %p231 = scmp.eq.s32.totalorder %s23, 3
      %p232 = por %p230, %p231
      %p233 = scmp.ne.s32.totalorder %s225, %s228
      %p234 = scmp.eq.s32.totalorder %s23, 0
      %p235 = por %p233, %p234
      %p236 = scmp.ne.s32.totalorder %s225, %s228
      %p237 = scmp.eq.s32.totalorder %s28, 3
      %p238 = por %p236, %p237
      %p239 = scmp.ne.s32.totalorder %s228, %s229
      %p240 = scmp.eq.s32.totalorder %s28, 0
      %p241 = por %p239, %p240
      %p242 = scmp.ne.s32.totalorder %s228, %s229
      %p243 = scmp.eq.s32.totalorder %s29, 3
      %p244 = por %p242, %p243
      %p246 = scmp.ne.s32.totalorder %s229, %s245
      %p247 = scmp.eq.s32.totalorder %s29, 0
      %p248 = por %p246, %p247
      %p249 = scmp.le.s32.totalorder 1, %s23
      %p250 = scmp.lt.s32.totalorder %s23, 5
      %p251 = pnand %p249, %p250
      %p252 = pneg %p251
      // Predicated region
      $region9: #{fagcn_forward.5} parent=5 // pred_check
        _
      $region10: #{fagcn_forward.5} parent=5 // pred_check_branch
        %254 = sbr.rel (%p251) target = $region12
      $region11: #{fagcn_forward.5} parent=5 // pred_region
        %s255 = ssub.s32 %s23, 1
      $region12: #{fagcn_forward.5} parent=5 // pred_fallthru
        _
      %p256 = scmp.lt.s32.totalorder %s23, 4
      // Predicated region
      $region13: #{fagcn_forward.5} parent=5 // pred_check
        %p257 = pneg %p256
      $region14: #{fagcn_forward.5} parent=5 // pred_check_branch
        %259 = sbr.rel (%p257) target = $region16
      $region15: #{fagcn_forward.5} parent=5 // pred_region
        // Predicated region
        $region17: #{fagcn_forward.5} parent=15 // pred_check
          %p260 = pneg %p71
        $region18: #{fagcn_forward.5} parent=15 // pred_check_branch
          %262 = sbr.rel (%p260) target = $region20
        $region19: #{fagcn_forward.5} parent=15 // pred_region
          %s263 = sshra.s32 %s31, 7
          %s264 = sand.u32 %s31, 127
          %s265 = sadd.s32 %s263, %s30
          %s266 = smul.u32 %s265, 128
          %s267 = sshra.s32 %s31, 7
          %s268 = sand.u32 %s31, 127
          %s269 = sadd.s32 %s266, %s268
          %s270 = sld [smem:[#allocation5 + %s269]]
          %p271 = scmp.lt.s32.totalorder %s270, 1
          %s272 = scalar_select %p271, %s270, 1
          %s273 = scalar_lea.vmem %s2, %s272
          %s274 = sshra.s32 %s31, 7
          %s275 = sand.u32 %s31, 127
          %s276 = sadd.s32 %s274, %s30
          %s277 = smul.u32 %s276, 128
          %s278 = sshra.s32 %s31, 7
          %s279 = sand.u32 %s31, 127
          %s280 = sadd.s32 %s277, %s279
          %s281 = sld [smem:[#allocation5 + %s280]]
        $region20: #{fagcn_forward.5} parent=15 // pred_fallthru
          _
        // Predicated region
        $region21: #{fagcn_forward.5} parent=15 // pred_check
          %p282 = pneg %p97
        $region22: #{fagcn_forward.5} parent=15 // pred_check_branch
          %284 = sbr.rel (%p282) target = $region24
        $region23: #{fagcn_forward.5} parent=15 // pred_region
          %s285 = smul.u32 16, %s30
          %p286 = scmp.lt.s32.totalorder %s285, 31
          %s287 = scalar_select %p286, %s285, 31
          %s288 = smul.addr %s287, 4
          %s289 = scalar_lea.vmem %s3, %s288
          %s290 = smul.u32 16, %s30
        $region24: #{fagcn_forward.5} parent=15 // pred_fallthru
          _
        // Predicated region
        $region25: #{fagcn_forward.5} parent=15 // pred_check
          %p291 = pneg %p141
        $region26: #{fagcn_forward.5} parent=15 // pred_check_branch
          %293 = sbr.rel (%p291) target = $region28
        $region27: #{fagcn_forward.5} parent=15 // pred_region
          %s294 = sand.u32 %s131, 1
          %s295 = sand.u32 %s131, 1
          %s296 = smul.addr %s295, 64
          %s297 = scalar_lea.vmem [#allocation6], %s296
          %s298 = sshra.s32 %s31, 7
          %s299 = sand.u32 %s31, 127
          %s300 = sadd.s32 %s298, %s30
          %s301 = smul.u32 %s300, 128
          %s302 = sshra.s32 %s31, 7
          %s303 = sand.u32 %s31, 127
          %s304 = sadd.s32 %s301, %s303
          %s305 = sld [smem:[#allocation5 + %s304]]
          %s306 = smul.u32 16, %s30
          %s307 = smul.addr %s306, 2
          %s308 = sadd.s32 %s305, %s307
          %s309 = smul.addr %s308, 4
          %s310 = scalar_lea.vmem %s4, %s309
          // Predicated region
          $region29: #{fagcn_forward.5} parent=27 // pred_check
            _
          $region30: #{fagcn_forward.5} parent=27 // pred_check_branch
            %312 = sbr.rel (0) target = $region32
          $region31: #{fagcn_forward.5} parent=27 // pred_region
            // Predicated region
            $region33: #{fagcn_forward.5} parent=31 // pred_check
              _
            $region34: #{fagcn_forward.5} parent=31 // pred_check_branch
              %314 = sbr.rel target = $region36
            $region35: #{fagcn_forward.5} parent=31 // pred_region
              // Predicated region
              $region48: #{fagcn_forward.5} parent=35 // pred_check
                _
              $region49: #{fagcn_forward.5} parent=35 // pred_check_branch
                %359 = sbr.rel (0) target = $region51
              $region50: #{fagcn_forward.5} parent=35 // pred_region
                loop: start=0, step=1, limit=1
                $region52: #{fagcn_forward.5} parent=50 // loop_pre_header
                  _
                $region53: #{fagcn_forward.5} parent=50 // loop_header
                  %s361 = sphi 0, %s365
                  %p362 = scmp.ge.s32.totalorder %s361, 1
                  %s366 = sphi %s310, %s310
                  %s367 = sphi %s297, %s297
                $region54: #{fagcn_forward.5} parent=50 // loop_header_branch
                  %364 = sbr.rel (%p362) target = $region58
                $region55: #{fagcn_forward.5} parent=50 // loop_body
                  _
                $region56: #{fagcn_forward.5} parent=50 // loop_footer
                  %s365 = sadd.s32 1, %s361
                $region57: #{fagcn_forward.5} parent=50 // loop_footer_branch
                  %360 = sbr.rel target = $region53
                $region58: #{fagcn_forward.5} parent=50 // loop_exit
                  _
                loop: start=0, step=1, limit=1
                $region59: #{fagcn_forward.5} parent=50 // loop_pre_header
                  _
                $region60: #{fagcn_forward.5} parent=50 // loop_header
                  %s370 = sphi 0, %s374
                  %p371 = scmp.ge.s32.totalorder %s370, 1
                  %s375 = sphi %s310, %s310
                  %s376 = sphi %s297, %s297
                $region61: #{fagcn_forward.5} parent=50 // loop_header_branch
                  %373 = sbr.rel (%p371) target = $region65
                $region62: #{fagcn_forward.5} parent=50 // loop_body
                  %v377 = vld [vmem:[%s375] sm:$0xf]
                  %378 = vst [vmem:[%s376] sm:$0xf] %v377
                  %v379 = vld [vmem:[%s375 + $0x8] sm:$0xf]
                  %380 = vst [vmem:[%s376 + $0x4] sm:$0xf] %v379
                  %v381 = vld [vmem:[%s375 + $0x10] sm:$0xf]
                  %382 = vst [vmem:[%s376 + $0x8] sm:$0xf] %v381
                  %v383 = vld [vmem:[%s375 + $0x18] sm:$0xf]
                  %384 = vst [vmem:[%s376 + $0xc] sm:$0xf] %v383
                  %v385 = vld [vmem:[%s375 + $0x20] sm:$0xf]
                  %386 = vst [vmem:[%s376 + $0x10] sm:$0xf] %v385
                  %v387 = vld [vmem:[%s375 + $0x28] sm:$0xf]
                  %388 = vst [vmem:[%s376 + $0x14] sm:$0xf] %v387
                  %v389 = vld [vmem:[%s375 + $0x30] sm:$0xf]
                  %390 = vst [vmem:[%s376 + $0x18] sm:$0xf] %v389
                  %v391 = vld [vmem:[%s375 + $0x38] sm:$0xf]
                  %392 = vst [vmem:[%s376 + $0x1c] sm:$0xf] %v391
                  %v393 = vld [vmem:[%s375 + $0x40] sm:$0xf]
                  %394 = vst [vmem:[%s376 + $0x20] sm:$0xf] %v393
                  %v395 = vld [vmem:[%s375 + $0x48] sm:$0xf]
                  %396 = vst [vmem:[%s376 + $0x24] sm:$0xf] %v395
                  %v397 = vld [vmem:[%s375 + $0x50] sm:$0xf]
                  %398 = vst [vmem:[%s376 + $0x28] sm:$0xf] %v397
                  %v399 = vld [vmem:[%s375 + $0x58] sm:$0xf]
                  %400 = vst [vmem:[%s376 + $0x2c] sm:$0xf] %v399
                  %v401 = vld [vmem:[%s375 + $0x60] sm:$0xf]
                  %402 = vst [vmem:[%s376 + $0x30] sm:$0xf] %v401
                  %v403 = vld [vmem:[%s375 + $0x68] sm:$0xf]
                  %404 = vst [vmem:[%s376 + $0x34] sm:$0xf] %v403
                  %v405 = vld [vmem:[%s375 + $0x70] sm:$0xf]
                  %406 = vst [vmem:[%s376 + $0x38] sm:$0xf] %v405
                  %v407 = vld [vmem:[%s375 + $0x78] sm:$0xf]
                  %408 = vst [vmem:[%s376 + $0x3c] sm:$0xf] %v407
                $region63: #{fagcn_forward.5} parent=50 // loop_footer
                  %s374 = sadd.s32 1, %s370
                $region64: #{fagcn_forward.5} parent=50 // loop_footer_branch
                  %369 = sbr.rel target = $region60
                $region65: #{fagcn_forward.5} parent=50 // loop_exit
                  _
              $region51: #{fagcn_forward.5} parent=35 // pred_fallthru
                _
            $region36: #{fagcn_forward.5} parent=31 // pred_fallthru
              _
            // Predicated region
            $region37: #{fagcn_forward.5} parent=31 // pred_check
              _
            $region38: #{fagcn_forward.5} parent=31 // pred_check_branch
              %316 = sbr.rel (0) target = $region40
            $region39: #{fagcn_forward.5} parent=31 // pred_region
              loop: start=0, step=1, limit=1
              $region41: #{fagcn_forward.5} parent=39 // loop_pre_header
                _
              $region42: #{fagcn_forward.5} parent=39 // loop_header
                %s319 = sphi 0, %s323
                %p320 = scmp.ge.s32.totalorder %s319, 1
                %s324 = sphi %s310, %s310
                %s325 = sphi %s297, %s297
              $region43: #{fagcn_forward.5} parent=39 // loop_header_branch
                %322 = sbr.rel (%p320) target = $region47
              $region44: #{fagcn_forward.5} parent=39 // loop_body
                %v326 = vld [vmem:[%s324] sm:$0xf]
                %327 = vst [vmem:[%s325] sm:$0xf] %v326
                %v328 = vld [vmem:[%s324 + $0x8] sm:$0xf]
                %329 = vst [vmem:[%s325 + $0x4] sm:$0xf] %v328
                %v330 = vld [vmem:[%s324 + $0x10] sm:$0xf]
                %331 = vst [vmem:[%s325 + $0x8] sm:$0xf] %v330
                %v332 = vld [vmem:[%s324 + $0x18] sm:$0xf]
                %333 = vst [vmem:[%s325 + $0xc] sm:$0xf] %v332
                %v334 = vld [vmem:[%s324 + $0x20] sm:$0xf]
                %335 = vst [vmem:[%s325 + $0x10] sm:$0xf] %v334
                %v336 = vld [vmem:[%s324 + $0x28] sm:$0xf]
                %337 = vst [vmem:[%s325 + $0x14] sm:$0xf] %v336
                %v338 = vld [vmem:[%s324 + $0x30] sm:$0xf]
                %339 = vst [vmem:[%s325 + $0x18] sm:$0xf] %v338
                %v340 = vld [vmem:[%s324 + $0x38] sm:$0xf]
                %341 = vst [vmem:[%s325 + $0x1c] sm:$0xf] %v340
                %v342 = vld [vmem:[%s324 + $0x40] sm:$0xf]
                %343 = vst [vmem:[%s325 + $0x20] sm:$0xf] %v342
                %v344 = vld [vmem:[%s324 + $0x48] sm:$0xf]
                %345 = vst [vmem:[%s325 + $0x24] sm:$0xf] %v344
                %v346 = vld [vmem:[%s324 + $0x50] sm:$0xf]
                %347 = vst [vmem:[%s325 + $0x28] sm:$0xf] %v346
                %v348 = vld [vmem:[%s324 + $0x58] sm:$0xf]
                %349 = vst [vmem:[%s325 + $0x2c] sm:$0xf] %v348
                %v350 = vld [vmem:[%s324 + $0x60] sm:$0xf]
                %351 = vst [vmem:[%s325 + $0x30] sm:$0xf] %v350
                %v352 = vld [vmem:[%s324 + $0x68] sm:$0xf]
                %353 = vst [vmem:[%s325 + $0x34] sm:$0xf] %v352
                %v354 = vld [vmem:[%s324 + $0x70] sm:$0xf]
                %355 = vst [vmem:[%s325 + $0x38] sm:$0xf] %v354
                %v356 = vld [vmem:[%s324 + $0x78] sm:$0xf]
                %357 = vst [vmem:[%s325 + $0x3c] sm:$0xf] %v356
              $region45: #{fagcn_forward.5} parent=39 // loop_footer
                %s323 = sadd.s32 1, %s319
              $region46: #{fagcn_forward.5} parent=39 // loop_footer_branch
                %318 = sbr.rel target = $region42
              $region47: #{fagcn_forward.5} parent=39 // loop_exit
                _
            $region40: #{fagcn_forward.5} parent=31 // pred_fallthru
              _
          $region32: #{fagcn_forward.5} parent=27 // pred_fallthru
            _
          %409 = vnop
        $region28: #{fagcn_forward.5} parent=15 // pred_fallthru
          _
        // Predicated region
        $region66: #{fagcn_forward.5} parent=15 // pred_check
          %p410 = pneg %p183
        $region67: #{fagcn_forward.5} parent=15 // pred_check_branch
          %412 = sbr.rel (%p410) target = $region69
        $region68: #{fagcn_forward.5} parent=15 // pred_region
          %s413 = sshra.s32 %s31, 7
          %s414 = sand.u32 %s31, 127
          %s415 = sadd.s32 %s413, %s30
          %s416 = smul.u32 %s415, 128
          %s417 = sshra.s32 %s31, 7
          %s418 = sand.u32 %s31, 127
          %s419 = sadd.s32 %s416, %s418
          %s420 = sld [smem:[#allocation5 + %s419]]
          %s421 = smul.u32 16, %s420
          %p422 = scmp.lt.s32.totalorder %s421, 31
          %s423 = scalar_select %p422, %s421, 31
          %s424 = smul.addr %s423, 4
          %s425 = scalar_lea.vmem %s5, %s424
          %s426 = sshra.s32 %s31, 7
          %s427 = sand.u32 %s31, 127
          %s428 = sadd.s32 %s426, %s30
          %s429 = smul.u32 %s428, 128
          %s430 = sshra.s32 %s31, 7
          %s431 = sand.u32 %s31, 127
          %s432 = sadd.s32 %s429, %s431
          %s433 = sld [smem:[#allocation5 + %s432]]
          %s434 = smul.u32 16, %s433
        $region69: #{fagcn_forward.5} parent=15 // pred_fallthru
          _
        // Predicated region
        $region70: #{fagcn_forward.5} parent=15 // pred_check
          %p435 = pneg %p209
        $region71: #{fagcn_forward.5} parent=15 // pred_check_branch
          %437 = sbr.rel (%p435) target = $region73
        $region72: #{fagcn_forward.5} parent=15 // pred_region
          %s438 = smul.u32 16, %s30
          %p439 = scmp.lt.s32.totalorder %s438, 31
          %s440 = scalar_select %p439, %s438, 31
          %s441 = smul.addr %s440, 8
          %s442 = scalar_lea.vmem %s6, %s441
          %s443 = smul.u32 16, %s30
        $region73: #{fagcn_forward.5} parent=15 // pred_fallthru
          _
      $region16: #{fagcn_forward.5} parent=5 // pred_fallthru
        _
      %p444 = scmp.le.s32.totalorder 1, %s23
      %p445 = scmp.lt.s32.totalorder %s23, 5
      %p446 = pnand %p444, %p445
      %p447 = pneg %p446
      // Predicated region
      $region74: #{fagcn_forward.5} parent=5 // pred_check
        _
      $region75: #{fagcn_forward.5} parent=5 // pred_check_branch
        %449 = sbr.rel (%p446) target = $region77
      $region76: #{fagcn_forward.5} parent=5 // pred_region
        %s450 = ssub.s32 %s23, 1
        %s451 = sand.u32 %s134, 1
        %s452 = sand.u32 %s134, 1
        %s453 = smul.addr %s452, 64
        %s454 = scalar_lea.vmem [#allocation6], %s453
        // Predicated region
        $region78: #{fagcn_forward.5} parent=76 // pred_check
          %p455 = pneg %p147
        $region79: #{fagcn_forward.5} parent=76 // pred_check_branch
          %457 = sbr.rel (%p455) target = $region81
        $region80: #{fagcn_forward.5} parent=76 // pred_region
          _
        $region81: #{fagcn_forward.5} parent=76 // pred_fallthru
          _
        %s458 = sshra.s32 %s33, 7
        %s459 = sand.u32 %s33, 127
        %s460 = sadd.s32 %s458, %s32
        %s461 = smul.u32 %s460, 128
        %s462 = sshra.s32 %s33, 7
        %s463 = sand.u32 %s33, 127
        %s464 = sadd.s32 %s461, %s463
        %s465 = sld [smem:[#allocation5 + %s464]]
        %p466 = scmp.lt.s32.totalorder %s465, 1
        %s467 = scalar_select %p466, %s465, 1
        %s468 = scalar_lea.vmem %s2, %s467
        %p469 = pneg %p77
        %p470 = pneg %p74
        %s471 = smul.u32 16, %s32
        %p472 = scmp.lt.s32.totalorder %s471, 31
        %s473 = scalar_select %p472, %s471, 31
        %s474 = smul.addr %s473, 4
        %s475 = scalar_lea.vmem %s3, %s474
        %p476 = pneg %p103
        %p477 = pneg %p100
        %s478 = sand.u32 %s134, 1
        %s479 = sand.u32 %s134, 1
        %s480 = smul.addr %s479, 64
        %s481 = scalar_lea.vmem [#allocation6], %s480
        %p482 = pneg %p147
        %p483 = pneg %p144
        %s484 = sshra.s32 %s33, 7
        %s485 = sand.u32 %s33, 127
        %s486 = sadd.s32 %s484, %s32
        %s487 = smul.u32 %s486, 128
        %s488 = sshra.s32 %s33, 7
        %s489 = sand.u32 %s33, 127
        %s490 = sadd.s32 %s487, %s489
        %s491 = sld [smem:[#allocation5 + %s490]]
        %s492 = smul.u32 16, %s491
        %p493 = scmp.lt.s32.totalorder %s492, 31
        %s494 = scalar_select %p493, %s492, 31
        %s495 = smul.addr %s494, 4
        %s496 = scalar_lea.vmem %s5, %s495
        %p497 = pneg %p189
        %p498 = pneg %p186
        %s499 = smul.u32 16, %s32
        %p500 = scmp.lt.s32.totalorder %s499, 31
        %s501 = scalar_select %p500, %s499, 31
        %s502 = smul.addr %s501, 8
        %s503 = scalar_lea.vmem %s6, %s502
        %p504 = pneg %p215
        %p505 = pneg %p212
        %p506 = pneg %p241
        %p507 = pneg %p238
        %s508 = smul.u32 16, %s32
        %p509 = scmp.lt.s32.totalorder %s508, 31
        %s510 = scalar_select %p509, %s508, 31
        %s511 = smul.addr %s510, 8
        %s512 = scalar_lea.vmem %s7, %s511
        %s513 = sshra.s32 %s33, 7
        %s514 = sand.u32 %s33, 127
        %s515 = sadd.s32 %s513, %s32
        %s516 = smul.u32 %s515, 128
        %s517 = sshra.s32 %s33, 7
        %s518 = sand.u32 %s33, 127
        %s519 = sadd.s32 %s516, %s518
        %s520 = sld [smem:[#allocation5 + %s519]]
        %p521 = scmp.lt.s32.totalorder %s520, 1
        %s522 = scalar_select %p521, %s520, 1
        %s523 = scalar_lea.vmem %s2, %s522
        %s524 = sshra.s32 %s33, 7
        %s525 = sand.u32 %s33, 127
        %s526 = sadd.s32 %s524, %s32
        %s527 = smul.u32 %s526, 128
        %s528 = sshra.s32 %s33, 7
        %s529 = sand.u32 %s33, 127
        %s530 = sadd.s32 %s527, %s529
        %s531 = sld [smem:[#allocation5 + %s530]]
        %s532 = smul.u32 16, %s32
        %p533 = scmp.lt.s32.totalorder %s532, 31
        %s534 = scalar_select %p533, %s532, 31
        %s535 = smul.addr %s534, 4
        %s536 = scalar_lea.vmem %s3, %s535
        %s537 = smul.u32 16, %s32
        %s538 = sshra.s32 %s33, 7
        %s539 = sand.u32 %s33, 127
        %s540 = sadd.s32 %s538, %s32
        %s541 = smul.u32 %s540, 128
        %s542 = sshra.s32 %s33, 7
        %s543 = sand.u32 %s33, 127
        %s544 = sadd.s32 %s541, %s543
        %s545 = sld [smem:[#allocation5 + %s544]]
        %s546 = smul.u32 16, %s32
        %s547 = sshra.s32 %s33, 7
        %s548 = sand.u32 %s33, 127
        %s549 = sadd.s32 %s547, %s32
        %s550 = smul.u32 %s549, 128
        %s551 = sshra.s32 %s33, 7
        %s552 = sand.u32 %s33, 127
        %s553 = sadd.s32 %s550, %s552
        %s554 = sld [smem:[#allocation5 + %s553]]
        %s555 = smul.u32 16, %s554
        %p556 = scmp.lt.s32.totalorder %s555, 31
        %s557 = scalar_select %p556, %s555, 31
        %s558 = smul.addr %s557, 4
        %s559 = scalar_lea.vmem %s5, %s558
        %s560 = sshra.s32 %s33, 7
        %s561 = sand.u32 %s33, 127
        %s562 = sadd.s32 %s560, %s32
        %s563 = smul.u32 %s562, 128
        %s564 = sshra.s32 %s33, 7
        %s565 = sand.u32 %s33, 127
        %s566 = sadd.s32 %s563, %s565
        %s567 = sld [smem:[#allocation5 + %s566]]
        %s568 = smul.u32 16, %s567
        %s569 = smul.u32 16, %s32
        %p570 = scmp.lt.s32.totalorder %s569, 31
        %s571 = scalar_select %p570, %s569, 31
        %s572 = smul.addr %s571, 8
        %s573 = scalar_lea.vmem %s6, %s572
        %s574 = smul.u32 16, %s32
        %s575 = smul.u32 16, %s32
        %p576 = scmp.lt.s32.totalorder %s575, 31
        %s577 = scalar_select %p576, %s575, 31
        %s578 = smul.addr %s577, 8
        %s579 = scalar_lea.vmem %s7, %s578
        %s580 = smul.u32 16, %s32
        %p582 = scmp.eq.s32.totalorder %s33, 0
        // Predicated region
        $region82: #{fagcn_forward.5} parent=76 // pred_check
          %p583 = pneg %p582
        $region83: #{fagcn_forward.5} parent=76 // pred_check_branch
          %585 = sbr.rel (%p583) target = $region85
        $region84: #{fagcn_forward.5} parent=76 // pred_region
          %vm586 = vcmask 261120
          %587 = vst.msk [vmem:[#allocation2] sm:$0xff] %vm586, 0.0
          %588 = vst.msk [vmem:[#allocation2 + $0x8] sm:$0xff] %vm586, 0.0
          %589 = vst.msk [vmem:[#allocation2 + $0x10] sm:$0xff] %vm586, 0.0
          %590 = vst.msk [vmem:[#allocation2 + $0x18] sm:$0xff] %vm586, 0.0
          %591 = vst.msk [vmem:[#allocation2 + $0x20] sm:$0xff] %vm586, 0.0
          %592 = vst.msk [vmem:[#allocation2 + $0x28] sm:$0xff] %vm586, 0.0
          %593 = vst.msk [vmem:[#allocation2 + $0x30] sm:$0xff] %vm586, 0.0
          %594 = vst.msk [vmem:[#allocation2 + $0x38] sm:$0xff] %vm586, 0.0
          %595 = vst.msk [vmem:[#allocation2 + $0x40] sm:$0xff] %vm586, 0.0
          %596 = vst.msk [vmem:[#allocation2 + $0x48] sm:$0xff] %vm586, 0.0
          %597 = vst.msk [vmem:[#allocation2 + $0x50] sm:$0xff] %vm586, 0.0
          %598 = vst.msk [vmem:[#allocation2 + $0x58] sm:$0xff] %vm586, 0.0
          %599 = vst.msk [vmem:[#allocation2 + $0x60] sm:$0xff] %vm586, 0.0
          %600 = vst.msk [vmem:[#allocation2 + $0x68] sm:$0xff] %vm586, 0.0
          %601 = vst.msk [vmem:[#allocation2 + $0x70] sm:$0xff] %vm586, 0.0
          %602 = vst.msk [vmem:[#allocation2 + $0x78] sm:$0xff] %vm586, 0.0
        $region85: #{fagcn_forward.5} parent=76 // pred_fallthru
          _
        %s603 = sshra.s32 %s33, 7
        %s604 = sand.u32 %s33, 127
        %s605 = sadd.s32 %s603, %s32
        %s606 = smul.u32 %s605, 128
        %s607 = sshra.s32 %s33, 7
        %s608 = sand.u32 %s33, 127
        %s609 = sadd.s32 %s606, %s608
        %s610 = sld [smem:[#allocation4 + %s609]]
        %p611 = scmp.gt.s32.totalorder %s610, 0
        // Predicated region
        $region86: #{fagcn_forward.5} parent=76 // pred_check
          %p612 = pneg %p611
        $region87: #{fagcn_forward.5} parent=76 // pred_check_branch
          %614 = sbr.rel (%p612) target = $region89
        $region88: #{fagcn_forward.5} parent=76 // pred_region
          %v615 = vld [vmem:[%s536] sm:$0xf]
          %v616 = vld [vmem:[%s536 + $0x4] sm:$0xf]
          %v617 = vld [vmem:[%s536 + $0x8] sm:$0xf]
          %v618 = vld [vmem:[%s536 + $0xc] sm:$0xf]
          %v619 = vld [vmem:[%s536 + $0x10] sm:$0xf]
          %v620 = vld [vmem:[%s536 + $0x14] sm:$0xf]
          %v621 = vld [vmem:[%s536 + $0x18] sm:$0xf]
          %v622 = vld [vmem:[%s536 + $0x1c] sm:$0xf]
          %v623 = vld [vmem:[%s536 + $0x20] sm:$0xf]
          %v624 = vld [vmem:[%s536 + $0x24] sm:$0xf]
          %v625 = vld [vmem:[%s536 + $0x28] sm:$0xf]
          %v626 = vld [vmem:[%s536 + $0x2c] sm:$0xf]
          %v627 = vld [vmem:[%s536 + $0x30] sm:$0xf]
          %v628 = vld [vmem:[%s536 + $0x34] sm:$0xf]
          %v629 = vld [vmem:[%s536 + $0x38] sm:$0xf]
          %v630 = vld [vmem:[%s536 + $0x3c] sm:$0xf]
          %v631 = vld [vmem:[%s523] sm:$0x1]
          %633 = vset.pattern.permute.xlu0 0
          %634 = vperm.xlu0 %633, %v615
          %v635 = vpop.permute.xlu0 %634
          %v638 = vunpack.c.l.s4 839922192
          %v639 = vunpack.c.0.s8 %v638
          %v640 = vlaneseq
          %v641 = vshrl.u32 %v640, 7
          %v642 = vsub.s32 %v639, %v641
          %v643 = vrot.slane %v635, %v642
          %645 = vset.pattern.permute.xlu0 0
          %646 = vperm.xlu0 %645, %v616
          %v647 = vpop.permute.xlu0 %646
          %v650 = vunpack.c.l.s4 839922192
          %v651 = vunpack.c.0.s8 %v650
          %v652 = vlaneseq
          %v653 = vshrl.u32 %v652, 7
          %v654 = vsub.s32 %v651, %v653
          %v655 = vrot.slane %v647, %v654
          %657 = vset.pattern.permute.xlu0 0
          %658 = vperm.xlu0 %657, %v617
          %v659 = vpop.permute.xlu0 %658
          %v662 = vunpack.c.l.s4 839922192
          %v663 = vunpack.c.0.s8 %v662
          %v664 = vlaneseq
          %v665 = vshrl.u32 %v664, 7
          %v666 = vsub.s32 %v663, %v665
          %v667 = vrot.slane %v659, %v666
          %669 = vset.pattern.permute.xlu0 0
          %670 = vperm.xlu0 %669, %v618
          %v671 = vpop.permute.xlu0 %670
          %v674 = vunpack.c.l.s4 839922192
          %v675 = vunpack.c.0.s8 %v674
          %v676 = vlaneseq
          %v677 = vshrl.u32 %v676, 7
          %v678 = vsub.s32 %v675, %v677
          %v679 = vrot.slane %v671, %v678
          %681 = vset.pattern.permute.xlu0 0
          %682 = vperm.xlu0 %681, %v619
          %v683 = vpop.permute.xlu0 %682
          %v686 = vunpack.c.l.s4 839922192
          %v687 = vunpack.c.0.s8 %v686
          %v688 = vlaneseq
          %v689 = vshrl.u32 %v688, 7
          %v690 = vsub.s32 %v687, %v689
          %v691 = vrot.slane %v683, %v690
          %693 = vset.pattern.permute.xlu0 0
          %694 = vperm.xlu0 %693, %v620
          %v695 = vpop.permute.xlu0 %694
          %v698 = vunpack.c.l.s4 839922192
          %v699 = vunpack.c.0.s8 %v698
          %v700 = vlaneseq
          %v701 = vshrl.u32 %v700, 7
          %v702 = vsub.s32 %v699, %v701
          %v703 = vrot.slane %v695, %v702
          %705 = vset.pattern.permute.xlu0 0
          %706 = vperm.xlu0 %705, %v621
          %v707 = vpop.permute.xlu0 %706
          %v710 = vunpack.c.l.s4 839922192
          %v711 = vunpack.c.0.s8 %v710
          %v712 = vlaneseq
          %v713 = vshrl.u32 %v712, 7
          %v714 = vsub.s32 %v711, %v713
          %v715 = vrot.slane %v707, %v714
          %717 = vset.pattern.permute.xlu0 0
          %718 = vperm.xlu0 %717, %v622
          %v719 = vpop.permute.xlu0 %718
          %v722 = vunpack.c.l.s4 839922192
          %v723 = vunpack.c.0.s8 %v722
          %v724 = vlaneseq
          %v725 = vshrl.u32 %v724, 7
          %v726 = vsub.s32 %v723, %v725
          %v727 = vrot.slane %v719, %v726
          %729 = vset.pattern.permute.xlu0 0
          %730 = vperm.xlu0 %729, %v623
          %v731 = vpop.permute.xlu0 %730
          %v734 = vunpack.c.l.s4 839922192
          %v735 = vunpack.c.0.s8 %v734
          %v736 = vlaneseq
          %v737 = vshrl.u32 %v736, 7
          %v738 = vsub.s32 %v735, %v737
          %v739 = vrot.slane %v731, %v738
          %741 = vset.pattern.permute.xlu0 0
          %742 = vperm.xlu0 %741, %v624
          %v743 = vpop.permute.xlu0 %742
          %v746 = vunpack.c.l.s4 839922192
          %v747 = vunpack.c.0.s8 %v746
          %v748 = vlaneseq
          %v749 = vshrl.u32 %v748, 7
          %v750 = vsub.s32 %v747, %v749
          %v751 = vrot.slane %v743, %v750
          %753 = vset.pattern.permute.xlu0 0
          %754 = vperm.xlu0 %753, %v625
          %v755 = vpop.permute.xlu0 %754
          %v758 = vunpack.c.l.s4 839922192
          %v759 = vunpack.c.0.s8 %v758
          %v760 = vlaneseq
          %v761 = vshrl.u32 %v760, 7
          %v762 = vsub.s32 %v759, %v761
          %v763 = vrot.slane %v755, %v762
          %765 = vset.pattern.permute.xlu0 0
          %766 = vperm.xlu0 %765, %v626
          %v767 = vpop.permute.xlu0 %766
          %v770 = vunpack.c.l.s4 839922192
          %v771 = vunpack.c.0.s8 %v770
          %v772 = vlaneseq
          %v773 = vshrl.u32 %v772, 7
          %v774 = vsub.s32 %v771, %v773
          %v775 = vrot.slane %v767, %v774
          %777 = vset.pattern.permute.xlu0 0
          %778 = vperm.xlu0 %777, %v627
          %v779 = vpop.permute.xlu0 %778
          %v782 = vunpack.c.l.s4 839922192
          %v783 = vunpack.c.0.s8 %v782
          %v784 = vlaneseq
          %v785 = vshrl.u32 %v784, 7
          %v786 = vsub.s32 %v783, %v785
          %v787 = vrot.slane %v779, %v786
          %789 = vset.pattern.permute.xlu0 0
          %790 = vperm.xlu0 %789, %v628
          %v791 = vpop.permute.xlu0 %790
          %v794 = vunpack.c.l.s4 839922192
          %v795 = vunpack.c.0.s8 %v794
          %v796 = vlaneseq
          %v797 = vshrl.u32 %v796, 7
          %v798 = vsub.s32 %v795, %v797
          %v799 = vrot.slane %v791, %v798
          %801 = vset.pattern.permute.xlu0 0
          %802 = vperm.xlu0 %801, %v629
          %v803 = vpop.permute.xlu0 %802
          %v806 = vunpack.c.l.s4 839922192
          %v807 = vunpack.c.0.s8 %v806
          %v808 = vlaneseq
          %v809 = vshrl.u32 %v808, 7
          %v810 = vsub.s32 %v807, %v809
          %v811 = vrot.slane %v803, %v810
          %813 = vset.pattern.permute.xlu0 0
          %814 = vperm.xlu0 %813, %v630
          %v815 = vpop.permute.xlu0 %814
          %v818 = vunpack.c.l.s4 839922192
          %v819 = vunpack.c.0.s8 %v818
          %v820 = vlaneseq
          %v821 = vshrl.u32 %v820, 7
          %v822 = vsub.s32 %v819, %v821
          %v823 = vrot.slane %v815, %v822
          %v825 = vpack.i.b16 %v631, %v631
          %v827 = vlaneseq
          %v828 = vshrl.u32 %v827, 7
          %v829 = vsub.s32 0, %v828
          %v830 = vrot.slane %v825, %v829
          %v832 = vunpack.c.l.b16 %v830
          %v833 = vpack.c.b16 %v832, %v832
          %v835 = vadd.bf16 %v643, %v833
          %v836 = vadd.bf16 %v655, %v833
          %v837 = vadd.bf16 %v667, %v833
          %v838 = vadd.bf16 %v679, %v833
          %v839 = vadd.bf16 %v691, %v833
          %v840 = vadd.bf16 %v703, %v833
          %v841 = vadd.bf16 %v715, %v833
          %v842 = vadd.bf16 %v727, %v833
          %v843 = vadd.bf16 %v739, %v833
          %v844 = vadd.bf16 %v751, %v833
          %v845 = vadd.bf16 %v763, %v833
          %v846 = vadd.bf16 %v775, %v833
          %v847 = vadd.bf16 %v787, %v833
          %v848 = vadd.bf16 %v799, %v833
          %v849 = vadd.bf16 %v811, %v833
          %v850 = vadd.bf16 %v823, %v833
          %v851 = vtanh.bf16.pop %v835
          %v852 = vtanh.bf16.pop %v836
          %v853 = vtanh.bf16.pop %v837
          %v854 = vtanh.bf16.pop %v838
          %v855 = vtanh.bf16.pop %v839
          %v856 = vtanh.bf16.pop %v840
          %v857 = vtanh.bf16.pop %v841
          %v858 = vtanh.bf16.pop %v842
          %v859 = vtanh.bf16.pop %v843
          %v860 = vtanh.bf16.pop %v844
          %v861 = vtanh.bf16.pop %v845
          %v862 = vtanh.bf16.pop %v846
          %v863 = vtanh.bf16.pop %v847
          %v864 = vtanh.bf16.pop %v848
          %v865 = vtanh.bf16.pop %v849
          %v866 = vtanh.bf16.pop %v850
          %v867 = vld [vmem:[%s454] sm:$0xf]
          %v868 = vld [vmem:[%s454 + $0x4] sm:$0xf]
          %v869 = vld [vmem:[%s454 + $0x8] sm:$0xf]
          %v870 = vld [vmem:[%s454 + $0xc] sm:$0xf]
          %v871 = vld [vmem:[%s454 + $0x10] sm:$0xf]
          %v872 = vld [vmem:[%s454 + $0x14] sm:$0xf]
          %v873 = vld [vmem:[%s454 + $0x18] sm:$0xf]
          %v874 = vld [vmem:[%s454 + $0x1c] sm:$0xf]
          %v875 = vld [vmem:[%s454 + $0x20] sm:$0xf]
          %v876 = vld [vmem:[%s454 + $0x24] sm:$0xf]
          %v877 = vld [vmem:[%s454 + $0x28] sm:$0xf]
          %v878 = vld [vmem:[%s454 + $0x2c] sm:$0xf]
          %v879 = vld [vmem:[%s454 + $0x30] sm:$0xf]
          %v880 = vld [vmem:[%s454 + $0x34] sm:$0xf]
          %v881 = vld [vmem:[%s454 + $0x38] sm:$0xf]
          %v882 = vld [vmem:[%s454 + $0x3c] sm:$0xf]
          %v883 = vmul.bf16 %v867, %v851
          %v884 = vmul.bf16 %v868, %v852
          %v885 = vmul.bf16 %v869, %v853
          %v886 = vmul.bf16 %v870, %v854
          %v887 = vmul.bf16 %v871, %v855
          %v888 = vmul.bf16 %v872, %v856
          %v889 = vmul.bf16 %v873, %v857
          %v890 = vmul.bf16 %v874, %v858
          %v891 = vmul.bf16 %v875, %v859
          %v892 = vmul.bf16 %v876, %v860
          %v893 = vmul.bf16 %v877, %v861
          %v894 = vmul.bf16 %v878, %v862
          %v895 = vmul.bf16 %v879, %v863
          %v896 = vmul.bf16 %v880, %v864
          %v897 = vmul.bf16 %v881, %v865
          %v898 = vmul.bf16 %v882, %v866
          %v899 = vld [vmem:[#allocation2] sm:$0xff]
          %v900 = vld [vmem:[#allocation2 + $0x8] sm:$0xff]
          %v901 = vld [vmem:[#allocation2 + $0x10] sm:$0xff]
          %v902 = vld [vmem:[#allocation2 + $0x18] sm:$0xff]
          %v903 = vld [vmem:[#allocation2 + $0x20] sm:$0xff]
          %v904 = vld [vmem:[#allocation2 + $0x28] sm:$0xff]
          %v905 = vld [vmem:[#allocation2 + $0x30] sm:$0xff]
          %v906 = vld [vmem:[#allocation2 + $0x38] sm:$0xff]
          %v907 = vld [vmem:[#allocation2 + $0x40] sm:$0xff]
          %v908 = vld [vmem:[#allocation2 + $0x48] sm:$0xff]
          %v909 = vld [vmem:[#allocation2 + $0x50] sm:$0xff]
          %v910 = vld [vmem:[#allocation2 + $0x58] sm:$0xff]
          %v911 = vld [vmem:[#allocation2 + $0x60] sm:$0xff]
          %v912 = vld [vmem:[#allocation2 + $0x68] sm:$0xff]
          %v913 = vld [vmem:[#allocation2 + $0x70] sm:$0xff]
          %v914 = vld [vmem:[#allocation2 + $0x78] sm:$0xff]
          %v915 = vld [vmem:[%s559] sm:$0xf]
          %v916 = vld [vmem:[%s559 + $0x4] sm:$0xf]
          %v917 = vld [vmem:[%s559 + $0x8] sm:$0xf]
          %v918 = vld [vmem:[%s559 + $0xc] sm:$0xf]
          %v919 = vld [vmem:[%s559 + $0x10] sm:$0xf]
          %v920 = vld [vmem:[%s559 + $0x14] sm:$0xf]
          %v921 = vld [vmem:[%s559 + $0x18] sm:$0xf]
          %v922 = vld [vmem:[%s559 + $0x1c] sm:$0xf]
          %v923 = vld [vmem:[%s559 + $0x20] sm:$0xf]
          %v924 = vld [vmem:[%s559 + $0x24] sm:$0xf]
          %v925 = vld [vmem:[%s559 + $0x28] sm:$0xf]
          %v926 = vld [vmem:[%s559 + $0x2c] sm:$0xf]
          %v927 = vld [vmem:[%s559 + $0x30] sm:$0xf]
          %v928 = vld [vmem:[%s559 + $0x34] sm:$0xf]
          %v929 = vld [vmem:[%s559 + $0x38] sm:$0xf]
          %v930 = vld [vmem:[%s559 + $0x3c] sm:$0xf]
          %v947 = vunpack.c.l.b16 %v883
          %v948 = vunpack.c.l.b16 %v884
          %v949 = vunpack.c.l.b16 %v885
          %v950 = vunpack.c.l.b16 %v886
          %v951 = vunpack.c.l.b16 %v887
          %v952 = vunpack.c.l.b16 %v888
          %v953 = vunpack.c.l.b16 %v889
          %v954 = vunpack.c.l.b16 %v890
          %v955 = vunpack.c.l.b16 %v891
          %v956 = vunpack.c.l.b16 %v892
          %v957 = vunpack.c.l.b16 %v893
          %v958 = vunpack.c.l.b16 %v894
          %v959 = vunpack.c.l.b16 %v895
          %v960 = vunpack.c.l.b16 %v896
          %v961 = vunpack.c.l.b16 %v897
          %v962 = vunpack.c.l.b16 %v898
          %v963 = vpack.c.b16 %v948, %v947
          %v964 = vpack.c.b16 %v950, %v949
          %v965 = vpack.c.b16 %v952, %v951
          %v966 = vpack.c.b16 %v954, %v953
          %v967 = vpack.c.b16 %v956, %v955
          %v968 = vpack.c.b16 %v958, %v957
          %v969 = vpack.c.b16 %v960, %v959
          %v970 = vpack.c.b16 %v962, %v961
          %v995 = vunpack.c.l.b16 %v915
          %v996 = vunpack.c.l.b16 %v916
          %v997 = vunpack.c.l.b16 %v917
          %v998 = vunpack.c.l.b16 %v918
          %v999 = vunpack.c.l.b16 %v919
          %v1000 = vunpack.c.l.b16 %v920
          %v1001 = vunpack.c.l.b16 %v921
          %v1002 = vunpack.c.l.b16 %v922
          %v1003 = vunpack.c.l.b16 %v923
          %v1004 = vunpack.c.l.b16 %v924
          %v1005 = vunpack.c.l.b16 %v925
          %v1006 = vunpack.c.l.b16 %v926
          %v1007 = vunpack.c.l.b16 %v927
          %v1008 = vunpack.c.l.b16 %v928
          %v1009 = vunpack.c.l.b16 %v929
          %v1010 = vunpack.c.l.b16 %v930
          %v1011 = vpack.c.b16 %v996, %v995
          %v1012 = vpack.c.b16 %v998, %v997
          %v1013 = vpack.c.b16 %v1000, %v999
          %v1014 = vpack.c.b16 %v1002, %v1001
          %v1015 = vpack.c.b16 %v1004, %v1003
          %v1016 = vpack.c.b16 %v1006, %v1005
          %v1017 = vpack.c.b16 %v1008, %v1007
          %v1018 = vpack.c.b16 %v1010, %v1009
          %1027 = vmatprep.subr.bf16.mxu0 0
          %1028 = vmatpush1.bf16.msra.mxu0 %v1011
          %1029 = vmatprep.subr.bf16.mxu0 0
          %1030 = vmatpush1.bf16.msra.mxu0 %v1012
          %1031 = vmatprep.subr.bf16.mxu0 0
          %1032 = vmatpush1.bf16.msra.mxu0 %v1013
          %1033 = vmatprep.subr.bf16.mxu0 0
          %1034 = vmatpush1.bf16.msra.mxu0 %v1014
          %1035 = vmatprep.subr.bf16.mxu0 0
          %1036 = vmatpush1.bf16.msra.mxu0 %v1015
          %1037 = vmatprep.subr.bf16.mxu0 0
          %1038 = vmatpush1.bf16.msra.mxu0 %v1016
          %1039 = vmatprep.subr.bf16.mxu0 0
          %1040 = vmatpush1.bf16.msra.mxu0 %v1017
          %1041 = vmatprep.subr.bf16.mxu0 0
          %1042 = vmatpush1.bf16.msra.mxu0 %v1018
          %1043 = vmatprep.subr.bf16.mxu0 0
          %1044 = vmatpush1.bf16.msra.mxu0 0
          %1045 = vmatprep.subr.bf16.mxu0 0
          %1046 = vmatpush1.bf16.msra.mxu0 0
          %1047 = vmatprep.subr.bf16.mxu0 0
          %1048 = vmatpush1.bf16.msra.mxu0 0
          %1049 = vmatprep.subr.bf16.mxu0 0
          %1050 = vmatpush1.bf16.msra.mxu0 0
          %1051 = vmatprep.subr.bf16.mxu0 0
          %1052 = vmatpush1.bf16.msra.mxu0 0
          %1053 = vmatprep.subr.bf16.mxu0 0
          %1054 = vmatpush1.bf16.msra.mxu0 0
          %1055 = vmatprep.subr.bf16.mxu0 0
          %1056 = vmatpush1.bf16.msra.mxu0 0
          %1057 = vmatprep.subr.bf16.mxu0 0
          %1058 = vmatpush1.bf16.msra.mxu0 0
          %1059 = vmatprep.mubr.bf16.mxu0 0
          %1060 = vmatmul.mubr.bf16.gmra.mrb[0].mxu0 %v963
          %v1061 = vpop.f32.mrb[0].mxu0
          %v1062 = vadd.f32 0.0, %v1061
          %v1063 = vpop.f32.mrb[0].mxu0
          %v1064 = vpop.f32.mrb[0].mxu0
          %v1065 = vadd.f32 0.0, %v1064
          %v1066 = vpop.f32.mrb[0].mxu0
          %1067 = vmatprep.mubr.bf16.mxu0 0
          %1068 = vmatmul.mubr.bf16.gmra.mrb[0].mxu0 %v964
          %v1069 = vpop.f32.mrb[0].mxu0
          %v1070 = vadd.f32 0.0, %v1069
          %v1071 = vpop.f32.mrb[0].mxu0
          %v1072 = vpop.f32.mrb[0].mxu0
          %v1073 = vadd.f32 0.0, %v1072
          %v1074 = vpop.f32.mrb[0].mxu0
          %1075 = vmatprep.mubr.bf16.mxu0 0
          %1076 = vmatmul.mubr.bf16.gmra.mrb[0].mxu0 %v965
          %v1077 = vpop.f32.mrb[0].mxu0
          %v1078 = vadd.f32 0.0, %v1077
          %v1079 = vpop.f32.mrb[0].mxu0
          %v1080 = vpop.f32.mrb[0].mxu0
          %v1081 = vadd.f32 0.0, %v1080
          %v1082 = vpop.f32.mrb[0].mxu0
          %1083 = vmatprep.mubr.bf16.mxu0 0
          %1084 = vmatmul.mubr.bf16.gmra.mrb[0].mxu0 %v966
          %v1085 = vpop.f32.mrb[0].mxu0
          %v1086 = vadd.f32 0.0, %v1085
          %v1087 = vpop.f32.mrb[0].mxu0
          %v1088 = vpop.f32.mrb[0].mxu0
          %v1089 = vadd.f32 0.0, %v1088
          %v1090 = vpop.f32.mrb[0].mxu0
          %1091 = vmatprep.mubr.bf16.mxu0 0
          %1092 = vmatmul.mubr.bf16.gmra.mrb[0].mxu0 %v967
          %v1093 = vpop.f32.mrb[0].mxu0
          %v1094 = vadd.f32 0.0, %v1093
          %v1095 = vpop.f32.mrb[0].mxu0
          %v1096 = vpop.f32.mrb[0].mxu0
          %v1097 = vadd.f32 0.0, %v1096
          %v1098 = vpop.f32.mrb[0].mxu0
          %1099 = vmatprep.mubr.bf16.mxu0 0
          %1100 = vmatmul.mubr.bf16.gmra.mrb[0].mxu0 %v968
          %v1101 = vpop.f32.mrb[0].mxu0
          %v1102 = vadd.f32 0.0, %v1101
          %v1103 = vpop.f32.mrb[0].mxu0
          %v1104 = vpop.f32.mrb[0].mxu0
          %v1105 = vadd.f32 0.0, %v1104
          %v1106 = vpop.f32.mrb[0].mxu0
          %1107 = vmatprep.mubr.bf16.mxu0 0
          %1108 = vmatmul.mubr.bf16.gmra.mrb[0].mxu0 %v969
          %v1109 = vpop.f32.mrb[0].mxu0
          %v1110 = vadd.f32 0.0, %v1109
          %v1111 = vpop.f32.mrb[0].mxu0
          %v1112 = vpop.f32.mrb[0].mxu0
          %v1113 = vadd.f32 0.0, %v1112
          %v1114 = vpop.f32.mrb[0].mxu0
          %1115 = vmatprep.mubr.bf16.mxu0 0
          %1116 = vmatmul.mubr.bf16.gmra.mrb[0].mxu0 %v970
          %v1117 = vpop.f32.mrb[0].mxu0
          %v1118 = vadd.f32 0.0, %v1117
          %v1119 = vpop.f32.mrb[0].mxu0
          %v1120 = vpop.f32.mrb[0].mxu0
          %v1121 = vadd.f32 0.0, %v1120
          %v1122 = vpop.f32.mrb[0].mxu0
          %1123 = vdwg.mxu0
          %v1124 = vadd.f32 %v899, %v1062
          %v1125 = vadd.f32 %v900, %v1065
          %v1126 = vadd.f32 %v901, %v1070
          %v1127 = vadd.f32 %v902, %v1073
          %v1128 = vadd.f32 %v903, %v1078
          %v1129 = vadd.f32 %v904, %v1081
          %v1130 = vadd.f32 %v905, %v1086
          %v1131 = vadd.f32 %v906, %v1089
          %v1132 = vadd.f32 %v907, %v1094
          %v1133 = vadd.f32 %v908, %v1097
          %v1134 = vadd.f32 %v909, %v1102
          %v1135 = vadd.f32 %v910, %v1105
          %v1136 = vadd.f32 %v911, %v1110
          %v1137 = vadd.f32 %v912, %v1113
          %v1138 = vadd.f32 %v913, %v1118
          %v1139 = vadd.f32 %v914, %v1121
          %vm1140 = vcmask 261120
          %1141 = vst.msk [vmem:[#allocation2] sm:$0xff] %vm1140, %v1124
          %1142 = vst.msk [vmem:[#allocation2 + $0x8] sm:$0xff] %vm1140, %v1125
          %1143 = vst.msk [vmem:[#allocation2 + $0x10] sm:$0xff] %vm1140, %v1126
          %1144 = vst.msk [vmem:[#allocation2 + $0x18] sm:$0xff] %vm1140, %v1127
          %1145 = vst.msk [vmem:[#allocation2 + $0x20] sm:$0xff] %vm1140, %v1128
          %1146 = vst.msk [vmem:[#allocation2 + $0x28] sm:$0xff] %vm1140, %v1129
          %1147 = vst.msk [vmem:[#allocation2 + $0x30] sm:$0xff] %vm1140, %v1130
          %1148 = vst.msk [vmem:[#allocation2 + $0x38] sm:$0xff] %vm1140, %v1131
          %1149 = vst.msk [vmem:[#allocation2 + $0x40] sm:$0xff] %vm1140, %v1132
          %1150 = vst.msk [vmem:[#allocation2 + $0x48] sm:$0xff] %vm1140, %v1133
          %1151 = vst.msk [vmem:[#allocation2 + $0x50] sm:$0xff] %vm1140, %v1134
          %1152 = vst.msk [vmem:[#allocation2 + $0x58] sm:$0xff] %vm1140, %v1135
          %1153 = vst.msk [vmem:[#allocation2 + $0x60] sm:$0xff] %vm1140, %v1136
          %1154 = vst.msk [vmem:[#allocation2 + $0x68] sm:$0xff] %vm1140, %v1137
          %1155 = vst.msk [vmem:[#allocation2 + $0x70] sm:$0xff] %vm1140, %v1138
          %1156 = vst.msk [vmem:[#allocation2 + $0x78] sm:$0xff] %vm1140, %v1139
        $region89: #{fagcn_forward.5} parent=76 // pred_fallthru
          _
        %p1157 = scmp.eq.s32.totalorder %s33, 1
        // Predicated region
        $region90: #{fagcn_forward.5} parent=76 // pred_check
          %p1158 = pneg %p1157
        $region91: #{fagcn_forward.5} parent=76 // pred_check_branch
          %1160 = sbr.rel (%p1158) target = $region93
        $region92: #{fagcn_forward.5} parent=76 // pred_region
          %v1161 = vld [vmem:[#allocation2] sm:$0xff]
          %v1162 = vld [vmem:[#allocation2 + $0x8] sm:$0xff]
          %v1163 = vld [vmem:[#allocation2 + $0x10] sm:$0xff]
          %v1164 = vld [vmem:[#allocation2 + $0x18] sm:$0xff]
          %v1165 = vld [vmem:[#allocation2 + $0x20] sm:$0xff]
          %v1166 = vld [vmem:[#allocation2 + $0x28] sm:$0xff]
          %v1167 = vld [vmem:[#allocation2 + $0x30] sm:$0xff]
          %v1168 = vld [vmem:[#allocation2 + $0x38] sm:$0xff]
          %v1169 = vld [vmem:[#allocation2 + $0x40] sm:$0xff]
          %v1170 = vld [vmem:[#allocation2 + $0x48] sm:$0xff]
          %v1171 = vld [vmem:[#allocation2 + $0x50] sm:$0xff]
          %v1172 = vld [vmem:[#allocation2 + $0x58] sm:$0xff]
          %v1173 = vld [vmem:[#allocation2 + $0x60] sm:$0xff]
          %v1174 = vld [vmem:[#allocation2 + $0x68] sm:$0xff]
          %v1175 = vld [vmem:[#allocation2 + $0x70] sm:$0xff]
          %v1176 = vld [vmem:[#allocation2 + $0x78] sm:$0xff]
          %v1177 = vld [vmem:[%s573] sm:$0xff]
          %v1178 = vld [vmem:[%s573 + $0x8] sm:$0xff]
          %v1179 = vld [vmem:[%s573 + $0x10] sm:$0xff]
          %v1180 = vld [vmem:[%s573 + $0x18] sm:$0xff]
          %v1181 = vld [vmem:[%s573 + $0x20] sm:$0xff]
          %v1182 = vld [vmem:[%s573 + $0x28] sm:$0xff]
          %v1183 = vld [vmem:[%s573 + $0x30] sm:$0xff]
          %v1184 = vld [vmem:[%s573 + $0x38] sm:$0xff]
          %v1185 = vld [vmem:[%s573 + $0x40] sm:$0xff]
          %v1186 = vld [vmem:[%s573 + $0x48] sm:$0xff]
          %v1187 = vld [vmem:[%s573 + $0x50] sm:$0xff]
          %v1188 = vld [vmem:[%s573 + $0x58] sm:$0xff]
          %v1189 = vld [vmem:[%s573 + $0x60] sm:$0xff]
          %v1190 = vld [vmem:[%s573 + $0x68] sm:$0xff]
          %v1191 = vld [vmem:[%s573 + $0x70] sm:$0xff]
          %v1192 = vld [vmem:[%s573 + $0x78] sm:$0xff]
          %v1193 = vmul.f32 %v1177, 0.6
          %v1194 = vmul.f32 %v1178, 0.6
          %v1195 = vmul.f32 %v1179, 0.6
          %v1196 = vmul.f32 %v1180, 0.6
          %v1197 = vmul.f32 %v1181, 0.6
          %v1198 = vmul.f32 %v1182, 0.6
          %v1199 = vmul.f32 %v1183, 0.6
          %v1200 = vmul.f32 %v1184, 0.6
          %v1201 = vmul.f32 %v1185, 0.6
          %v1202 = vmul.f32 %v1186, 0.6
          %v1203 = vmul.f32 %v1187, 0.6
          %v1204 = vmul.f32 %v1188, 0.6
          %v1205 = vmul.f32 %v1189, 0.6
          %v1206 = vmul.f32 %v1190, 0.6
          %v1207 = vmul.f32 %v1191, 0.6
          %v1208 = vmul.f32 %v1192, 0.6
          %v1209 = vadd.f32 %v1161, %v1193
          %v1210 = vadd.f32 %v1162, %v1194
          %v1211 = vadd.f32 %v1163, %v1195
          %v1212 = vadd.f32 %v1164, %v1196
          %v1213 = vadd.f32 %v1165, %v1197
          %v1214 = vadd.f32 %v1166, %v1198
          %v1215 = vadd.f32 %v1167, %v1199
          %v1216 = vadd.f32 %v1168, %v1200
          %v1217 = vadd.f32 %v1169, %v1201
          %v1218 = vadd.f32 %v1170, %v1202
          %v1219 = vadd.f32 %v1171, %v1203
          %v1220 = vadd.f32 %v1172, %v1204
          %v1221 = vadd.f32 %v1173, %v1205
          %v1222 = vadd.f32 %v1174, %v1206
          %v1223 = vadd.f32 %v1175, %v1207
          %v1224 = vadd.f32 %v1176, %v1208
          %vm1225 = vcmask 261120
          %1226 = vst.msk [vmem:[%s579] sm:$0xff] %vm1225, %v1209
          %1227 = vst.msk [vmem:[%s579 + $0x8] sm:$0xff] %vm1225, %v1210
          %1228 = vst.msk [vmem:[%s579 + $0x10] sm:$0xff] %vm1225, %v1211
          %1229 = vst.msk [vmem:[%s579 + $0x18] sm:$0xff] %vm1225, %v1212
          %1230 = vst.msk [vmem:[%s579 + $0x20] sm:$0xff] %vm1225, %v1213
          %1231 = vst.msk [vmem:[%s579 + $0x28] sm:$0xff] %vm1225, %v1214
          %1232 = vst.msk [vmem:[%s579 + $0x30] sm:$0xff] %vm1225, %v1215
          %1233 = vst.msk [vmem:[%s579 + $0x38] sm:$0xff] %vm1225, %v1216
          %1234 = vst.msk [vmem:[%s579 + $0x40] sm:$0xff] %vm1225, %v1217
          %1235 = vst.msk [vmem:[%s579 + $0x48] sm:$0xff] %vm1225, %v1218
          %1236 = vst.msk [vmem:[%s579 + $0x50] sm:$0xff] %vm1225, %v1219
          %1237 = vst.msk [vmem:[%s579 + $0x58] sm:$0xff] %vm1225, %v1220
          %1238 = vst.msk [vmem:[%s579 + $0x60] sm:$0xff] %vm1225, %v1221
          %1239 = vst.msk [vmem:[%s579 + $0x68] sm:$0xff] %vm1225, %v1222
          %1240 = vst.msk [vmem:[%s579 + $0x70] sm:$0xff] %vm1225, %v1223
          %1241 = vst.msk [vmem:[%s579 + $0x78] sm:$0xff] %vm1225, %v1224
        $region93: #{fagcn_forward.5} parent=76 // pred_fallthru
          _
        %s1242 = smul.u32 16, %s32
        %p1243 = scmp.lt.s32.totalorder %s1242, 31
        %s1244 = scalar_select %p1243, %s1242, 31
        %s1245 = smul.addr %s1244, 8
        %s1246 = scalar_lea.vmem %s7, %s1245
        // Predicated region
        $region94: #{fagcn_forward.5} parent=76 // pred_check
          %p1247 = pneg %p238
        $region95: #{fagcn_forward.5} parent=76 // pred_check_branch
          %1249 = sbr.rel (%p1247) target = $region97
        $region96: #{fagcn_forward.5} parent=76 // pred_region
          %s1250 = smul.u32 16, %s32
        $region97: #{fagcn_forward.5} parent=76 // pred_fallthru
          _
      $region77: #{fagcn_forward.5} parent=5 // pred_fallthru
        _
      %p1251 = scmp.le.s32.totalorder 2, %s23
      // Predicated region
      $region98: #{fagcn_forward.5} parent=5 // pred_check
        %p1252 = pneg %p1251
      $region99: #{fagcn_forward.5} parent=5 // pred_check_branch
        %1254 = sbr.rel (%p1252) target = $region101
      $region100: #{fagcn_forward.5} parent=5 // pred_region
        %s1255 = ssub.s32 %s23, 2
        // Predicated region
        $region102: #{fagcn_forward.5} parent=100 // pred_check
          %p1256 = pneg %p244
        $region103: #{fagcn_forward.5} parent=100 // pred_check_branch
          %1258 = sbr.rel (%p1256) target = $region105
        $region104: #{fagcn_forward.5} parent=100 // pred_region
          %s1259 = smul.u32 16, %s34
          %p1260 = scmp.lt.s32.totalorder %s1259, 31
          %s1261 = scalar_select %p1260, %s1259, 31
          %s1262 = smul.addr %s1261, 8
          %s1263 = scalar_lea.vmem %s7, %s1262
        $region105: #{fagcn_forward.5} parent=100 // pred_fallthru
          _
      $region101: #{fagcn_forward.5} parent=5 // pred_fallthru
        _
    $region6: #{fagcn_forward.5} parent=1 // loop_footer
      %s27 = sadd.s32 1, %s23
    $region7: #{fagcn_forward.5} parent=1 // loop_footer_branch
      %22 = sbr.rel target = $region3
    $region8: #{fagcn_forward.5} parent=1 // loop_exit
      _

</llo_original>
